<compile_context>
chip_gen: v7x
topology: tpu7x:2x2x1
jax: 0.10.0
libtpu: 0.0.40
codegen_flags: <defaults>
</compile_context>

<pallas_src>
import math
from functools import partial

import jax
import jax.numpy as jnp
from jax.experimental import pallas as pl
from jax.experimental.pallas import tpu as pltpu


def _mha_kernel(x_ref, wqkv_ref, bqkv_ref, wf_ref, bf_ref, gamma_ref, beta_ref,
                final_ref, atted_ref,
                qkv_scr,
                *, heads: int, eps: float, tq: int, compute_dtype):
    # x_ref carries one full batch element: (1, S, D).
    D = x_ref.shape[-1]
    dh = D // heads
    scale = 1.0 / math.sqrt(dh)
    qi = pl.program_id(1)

    # ---- Fused QKV projection: one (S,D)@(D,3D) MXU call per batch element.
    # Runs only on the first q-tile; result persists in a single VMEM scratch
    # slab across the (sequential, "arbitrary") q-tile axis.
    @pl.when(qi == 0)
    def _project_qkv():
        x_full = x_ref[0].astype(compute_dtype)                        # (S, D)
        qkv = jnp.dot(x_full, wqkv_ref[...],
                      preferred_element_type=jnp.float32) + bqkv_ref[0]
        qkv_scr[...] = qkv.astype(qkv_scr.dtype)                       # (S, 3D)

    q_start = pl.multiple_of(qi * tq, tq)

    # ---- Per-head attention with the final projection fused into the loop:
    #   atted = bf + sum_h softmax(q_h k_h^T * scale) v_h @ Wf[h*dh:(h+1)*dh]
    # Accumulating the (tq, D) output directly avoids a per-head context
    # scratch and its lane-partial stores.
    # TODO(synk): pack multiple heads per MXU pass when dh < 128.
    acc = jnp.broadcast_to(bf_ref[0], (tq, D)).astype(jnp.float32)     # (tq, D)
    for h in range(heads):
        qh = qkv_scr[pl.ds(q_start, tq), pl.ds(h * dh, dh)]            # (tq, dh)
        kh = qkv_scr[:, pl.ds(D + h * dh, dh)]                         # (S, dh)
        vh = qkv_scr[:, pl.ds(2 * D + h * dh, dh)]                     # (S, dh)

        # Contract on the last dim of both operands: no kh.T relayout.
        s = jax.lax.dot_general(qh, kh, (((1,), (1,)), ((), ())),
                                preferred_element_type=jnp.float32) * scale
        s = s - jnp.max(s, axis=-1, keepdims=True)
        p = jnp.exp(s)
        p = p * pl.reciprocal(jnp.sum(p, axis=-1, keepdims=True), approx=True)

        ctx_h = jnp.dot(p.astype(compute_dtype), vh,
                        preferred_element_type=jnp.float32)            # (tq, dh)
        acc = acc + jnp.dot(ctx_h.astype(compute_dtype),
                            wf_ref[pl.ds(h * dh, dh), :],
                            preferred_element_type=jnp.float32)        # (tq, D)

    atted = acc                                                        # dropout p=0 -> identity
    atted_ref[0] = atted.astype(atted_ref.dtype)

    # ---- Residual + LayerNorm (f32 math).
    x_tile = x_ref[0, pl.ds(q_start, tq), :].astype(jnp.float32)
    resid = atted + x_tile
    mean = jnp.mean(resid, axis=-1, keepdims=True)
    cent = resid - mean
    var = jnp.mean(cent * cent, axis=-1, keepdims=True)
    inv = jax.lax.rsqrt(var + eps)
    final_ref[0] = (cent * inv * gamma_ref[0] + beta_ref[0]).astype(final_ref.dtype)


def multi_headed_attention(x, params, heads: int, eps: float = 1e-5,
                           q_tile: int | None = None, compute_dtype=None):
    """x: [B, S, D].  Returns (final_x, atted_x), matching the torch module."""
    B, S, D = x.shape
    wq, bq, wk, bk, wv, bv, wf, bf, gamma, beta = params

    if compute_dtype is None:
        compute_dtype = x.dtype  # matmul operand dtype (bf16 capable); accum f32

    # Fuse QKV weights/biases: one [D, 3D] weight, one [1, 3D] bias.
    wqkv = jnp.concatenate([wq, wk, wv], axis=1).astype(compute_dtype)
    bqkv = jnp.concatenate([bq, bk, bv], axis=0).reshape(1, 3 * D).astype(jnp.float32)
    wf_c = wf.astype(compute_dtype)
    bf2 = bf.reshape(1, D).astype(jnp.float32)
    g2 = gamma.reshape(1, D).astype(jnp.float32)
    be2 = beta.reshape(1, D).astype(jnp.float32)

    # Query-tile size: full S for small sequences, else 512-row tiles.
    if q_tile is None:
        q_tile = S if S <= 512 else 512
    if S % q_tile != 0:
        q_tile = S
    n_qt = S // q_tile

    x_spec = pl.BlockSpec((1, S, D), lambda b, qi: (b, 0, 0))
    out_spec = pl.BlockSpec((1, q_tile, D), lambda b, qi: (b, qi, 0))
    wqkv_spec = pl.BlockSpec((D, 3 * D), lambda b, qi: (0, 0))
    b3_spec = pl.BlockSpec((1, 3 * D), lambda b, qi: (0, 0))
    dd_spec = pl.BlockSpec((D, D), lambda b, qi: (0, 0))
    d1_spec = pl.BlockSpec((1, D), lambda b, qi: (0, 0))

    kernel = partial(_mha_kernel, heads=heads, eps=eps, tq=q_tile,
                     compute_dtype=compute_dtype)

    final_x, atted_x = pl.pallas_call(
        kernel,
        out_shape=(jax.ShapeDtypeStruct((B, S, D), x.dtype),
                   jax.ShapeDtypeStruct((B, S, D), x.dtype)),
        grid_spec=pltpu.PrefetchScalarGridSpec(
            num_scalar_prefetch=0,
            grid=(B, n_qt),
            in_specs=[x_spec,
                      wqkv_spec, b3_spec,   # fused Wqkv, bqkv
                      dd_spec, d1_spec,     # Wf, bf
                      d1_spec, d1_spec],    # gamma, beta
            out_specs=[out_spec, out_spec],
            scratch_shapes=[pltpu.VMEM((S, 3 * D), compute_dtype)]   # fused QKV
        ),
        compiler_params=pltpu.CompilerParams(
            # Batch axis can shard across megacore TCs; q-tile axis must stay
            # sequential so the qi==0 QKV projection precedes later tiles.
            dimension_semantics=("parallel", "arbitrary"),
            vmem_limit_bytes=64 * 1024 * 1024),
    )(x, wqkv, bqkv, wf_c, bf2, g2, be2)
    return final_x, atted_x


def _reference(x, params, heads, eps=1e-5):
    """Pure-JAX reference mirroring the PyTorch forward (mask=None)."""
    wq, bq, wk, bk, wv, bv, wf, bf, gamma, beta = params
    B, S, D = x.shape
    dh = D // heads
    q = (x @ wq + bq).reshape(B, S, heads, dh).transpose(0, 2, 1, 3)
    k = (x @ wk + bk).reshape(B, S, heads, dh).transpose(0, 2, 1, 3)
    v = (x @ wv + bv).reshape(B, S, heads, dh).transpose(0, 2, 1, 3)
    scores = jnp.einsum("bhqd,bhkd->bhqk", q, k) / math.sqrt(dh)
    p = jax.nn.softmax(scores, axis=-1)
    ctx = jnp.einsum("bhqk,bhkd->bhqd", p, v)
    ctx = ctx.transpose(0, 2, 1, 3).reshape(B, S, D)
    atted = ctx @ wf + bf
    resid = atted + x
    mean = resid.mean(-1, keepdims=True)
    var = ((resid - mean) ** 2).mean(-1, keepdims=True)
    final = (resid - mean) / jnp.sqrt(var + eps) * gamma + beta
    return final, atted


if __name__ == "__main__":
    B, S, D, HEADS = 2, 8, 32, 4

    key = jax.random.PRNGKey(0)
    ks = jax.random.split(key, 9)
    init = lambda k, shape: (jax.random.normal(k, shape, jnp.float32)
                             * (1.0 / math.sqrt(shape[0] if len(shape) > 1 else D)))
    wq = init(ks[0], (D, D)); bq = init(ks[1], (D,))
    wk = init(ks[2], (D, D)); bk = init(ks[3], (D,))
    wv = init(ks[4], (D, D)); bv = init(ks[5], (D,))
    wf = init(ks[6], (D, D)); bf = init(ks[7], (D,))
    gamma = jnp.ones((D,), jnp.float32)   # nn.LayerNorm defaults
    beta = jnp.zeros((D,), jnp.float32)
    params = (wq, bq, wk, bk, wv, bv, wf, bf, gamma, beta)

    x = jax.random.normal(ks[8], (B, S, D), jnp.float32)

    ref_final, ref_atted = _reference(x, params, HEADS)

    # f32 path (tolerance accounts for the approximate EUP reciprocal used in
    # the softmax denominator).
    final_x, atted_x = multi_headed_attention(x, params, HEADS)
    jax.block_until_ready((final_x, atted_x))
    assert jnp.allclose(final_x, ref_final, atol=5e-3, rtol=5e-3)
    assert jnp.allclose(atted_x, ref_atted, atol=5e-3, rtol=5e-3)

    # bf16-matmul path (f32 accumulation): low-precision MXU mode; looser
    # tolerance for bf16 rounding.
    final_bf, atted_bf = multi_headed_attention(x, params, HEADS,
                                                compute_dtype=jnp.bfloat16)
    jax.block_until_ready((final_bf, atted_bf))
    assert jnp.allclose(final_bf, ref_final, atol=2e-1, rtol=2e-1)
    assert jnp.allclose(atted_bf, ref_atted, atol=2e-1, rtol=2e-1)

    print("KERNEL_OK")
</pallas_src>

<mosaic_0001>
module attributes {stable_mosaic.version = 11 : i64} {
  func.func @_mha_kernel(%arg0: i32, %arg1: i32, %arg2: memref<1x8x32xf32, #tpu.memory_space<vmem>>, %arg3: memref<32x96xf32, #tpu.memory_space<vmem>>, %arg4: memref<1x96xf32, #tpu.memory_space<vmem>>, %arg5: memref<32x32xf32, #tpu.memory_space<vmem>>, %arg6: memref<1x32xf32, #tpu.memory_space<vmem>>, %arg7: memref<1x32xf32, #tpu.memory_space<vmem>>, %arg8: memref<1x32xf32, #tpu.memory_space<vmem>>, %arg9: memref<1x8x32xf32, #tpu.memory_space<vmem>>, %arg10: memref<1x8x32xf32, #tpu.memory_space<vmem>>, %arg11: memref<8x96xf32, #tpu.memory_space<vmem>>) attributes {dimension_semantics = [#tpu.dimension_semantics<parallel>, #tpu.dimension_semantics<arbitrary>], iteration_bounds = array<i64: 2, 1>, scalar_prefetch = 0 : i64, scratch_operands = 1 : i64, tpu.core_type = #tpu.core_type<tc>, window_params = [{transform_indices = @transform_0, window_bounds = array<i64: 1, 8, 32>}, {pipeline_mode = #tpu.pipeline_mode<synchronous>, transform_indices = @transform_1, window_bounds = array<i64: 32, 96>}, {pipeline_mode = #tpu.pipeline_mode<synchronous>, transform_indices = @transform_2, window_bounds = array<i64: 1, 96>}, {pipeline_mode = #tpu.pipeline_mode<synchronous>, transform_indices = @transform_3, window_bounds = array<i64: 32, 32>}, {pipeline_mode = #tpu.pipeline_mode<synchronous>, transform_indices = @transform_4, window_bounds = array<i64: 1, 32>}, {pipeline_mode = #tpu.pipeline_mode<synchronous>, transform_indices = @transform_5, window_bounds = array<i64: 1, 32>}, {pipeline_mode = #tpu.pipeline_mode<synchronous>, transform_indices = @transform_6, window_bounds = array<i64: 1, 32>}, {transform_indices = @transform_7, window_bounds = array<i64: 1, 8, 32>}, {transform_indices = @transform_8, window_bounds = array<i64: 1, 8, 32>}]} {
    %c0_i32 = arith.constant 0 : i32
    %0 = arith.cmpi eq, %arg1, %c0_i32 : i32
    %1 = arith.extui %0 : i1 to i32
    %c0_i32_0 = arith.constant 0 : i32
    %2 = arith.cmpi ne, %1, %c0_i32_0 : i32
    scf.if %2 {
      %c0_59 = arith.constant 0 : index
      %c0_60 = arith.constant 0 : index
      %c0_61 = arith.constant 0 : index
      %129 = vector.load %arg2[%c0_59, %c0_60, %c0_61] : memref<1x8x32xf32, #tpu.memory_space<vmem>>, vector<1x8x32xf32>
      %130 = vector.shape_cast %129 : vector<1x8x32xf32> to vector<8x32xf32>
      %c0_62 = arith.constant 0 : index
      %c0_63 = arith.constant 0 : index
      %131 = vector.load %arg3[%c0_62, %c0_63] : memref<32x96xf32, #tpu.memory_space<vmem>>, vector<32x96xf32>
      %cst_64 = arith.constant dense<0.000000e+00> : vector<8x96xf32>
      %132 = tpu.matmul %130, %131, %cst_64 {dimension_numbers = #tpu.dot_dimension_numbers<[1], [0], [0], [1], [0, 0, 1, 1], [], []>} : vector<8x32xf32>, vector<32x96xf32>, vector<8x96xf32> -> vector<8x96xf32>
      %c0_65 = arith.constant 0 : index
      %c0_66 = arith.constant 0 : index
      %133 = vector.load %arg4[%c0_65, %c0_66] : memref<1x96xf32, #tpu.memory_space<vmem>>, vector<1x96xf32>
      %134 = vector.shape_cast %133 : vector<1x96xf32> to vector<96xf32>
      %135 = vector.shape_cast %134 : vector<96xf32> to vector<1x96xf32>
      %136 = vector.broadcast %135 : vector<1x96xf32> to vector<8x96xf32>
      %137 = arith.addf %132, %136 : vector<8x96xf32>
      %c0_67 = arith.constant 0 : index
      %c0_68 = arith.constant 0 : index
      %138 = vector.load %arg11[%c0_67, %c0_68] : memref<8x96xf32, #tpu.memory_space<vmem>>, vector<8x96xf32>
      tpu.vector_store %arg11[%c0_67, %c0_68], %137 {strides = array<i32>} : memref<8x96xf32, #tpu.memory_space<vmem>>, vector<8x96xf32>,
    } else {
    }
    %c8_i32 = arith.constant 8 : i32
    %3 = arith.muli %arg1, %c8_i32 : i32
    %4 = tpu.assume_multiple %3, 8 : i32
    %c0 = arith.constant 0 : index
    %c0_1 = arith.constant 0 : index
    %5 = vector.load %arg6[%c0, %c0_1] : memref<1x32xf32, #tpu.memory_space<vmem>>, vector<1x32xf32>
    %6 = vector.shape_cast %5 : vector<1x32xf32> to vector<32xf32>
    %7 = vector.shape_cast %6 : vector<32xf32> to vector<1x32xf32>
    %8 = vector.broadcast %7 : vector<1x32xf32> to vector<8x32xf32>
    %9 = arith.index_cast %4 : i32 to index
    %c0_2 = arith.constant 0 : index
    %10 = vector.load %arg11[%9, %c0_2] : memref<8x96xf32, #tpu.memory_space<vmem>>, vector<8x8xf32>
    %c0_3 = arith.constant 0 : index
    %c32 = arith.constant 32 : index
    %11 = vector.load %arg11[%c0_3, %c32] : memref<8x96xf32, #tpu.memory_space<vmem>>, vector<8x8xf32>
    %c0_4 = arith.constant 0 : index
    %c64 = arith.constant 64 : index
    %12 = vector.load %arg11[%c0_4, %c64] : memref<8x96xf32, #tpu.memory_space<vmem>>, vector<8x8xf32>
    %cst = arith.constant dense<0.000000e+00> : vector<8x8xf32>
    %13 = tpu.matmul %10, %11, %cst {dimension_numbers = #tpu.dot_dimension_numbers<[1], [1], [0], [0], [0, 0, 1, 0], [], []>} : vector<8x8xf32>, vector<8x8xf32>, vector<8x8xf32> -> vector<8x8xf32>
    %cst_5 = arith.constant 0.353553385 : f32
    %14 = vector.broadcast %cst_5 : f32 to vector<8x8xf32>
    %15 = arith.mulf %13, %14 : vector<8x8xf32>
    %cst_6 = arith.constant dense<0xFF800000> : vector<8xf32>
    %16 = vector.multi_reduction <maximumf>, %15, %cst_6 [1] : vector<8x8xf32> to vector<8xf32>
    %17 = vector.shape_cast %16 : vector<8xf32> to vector<8x1xf32>
    %18 = vector.broadcast %17 : vector<8x1xf32> to vector<8x8xf32>
    %19 = arith.subf %15, %18 : vector<8x8xf32>
    %20 = math.exp %19 : vector<8x8xf32>
    %cst_7 = arith.constant dense<0.000000e+00> : vector<8xf32>
    %21 = vector.multi_reduction <add>, %20, %cst_7 [1] : vector<8x8xf32> to vector<8xf32>
    %22 = vector.shape_cast %21 : vector<8xf32> to vector<8x1xf32>
    %23 = tpu.reciprocal %22 {approx = true} : vector<8x1xf32> -> vector<8x1xf32>
    %24 = vector.broadcast %23 : vector<8x1xf32> to vector<8x8xf32>
    %25 = arith.mulf %20, %24 : vector<8x8xf32>
    %cst_8 = arith.constant dense<0.000000e+00> : vector<8x8xf32>
    %26 = tpu.matmul %25, %12, %cst_8 {dimension_numbers = #tpu.dot_dimension_numbers<[1], [0], [0], [1], [0, 0, 1, 1], [], []>} : vector<8x8xf32>, vector<8x8xf32>, vector<8x8xf32> -> vector<8x8xf32>
    %c0_9 = arith.constant 0 : index
    %c0_10 = arith.constant 0 : index
    %27 = vector.load %arg5[%c0_9, %c0_10] : memref<32x32xf32, #tpu.memory_space<vmem>>, vector<8x32xf32>
    %cst_11 = arith.constant dense<0.000000e+00> : vector<8x32xf32>
    %28 = tpu.matmul %26, %27, %cst_11 {dimension_numbers = #tpu.dot_dimension_numbers<[1], [0], [0], [1], [0, 0, 1, 1], [], []>} : vector<8x8xf32>, vector<8x32xf32>, vector<8x32xf32> -> vector<8x32xf32>
    %29 = arith.addf %8, %28 : vector<8x32xf32>
    %30 = arith.index_cast %4 : i32 to index
    %c8 = arith.constant 8 : index
    %31 = vector.load %arg11[%30, %c8] : memref<8x96xf32, #tpu.memory_space<vmem>>, vector<8x8xf32>
    %c0_12 = arith.constant 0 : index
    %c40 = arith.constant 40 : index
    %32 = vector.load %arg11[%c0_12, %c40] : memref<8x96xf32, #tpu.memory_space<vmem>>, vector<8x8xf32>
    %c0_13 = arith.constant 0 : index
    %c72 = arith.constant 72 : index
    %33 = vector.load %arg11[%c0_13, %c72] : memref<8x96xf32, #tpu.memory_space<vmem>>, vector<8x8xf32>
    %cst_14 = arith.constant dense<0.000000e+00> : vector<8x8xf32>
    %34 = tpu.matmul %31, %32, %cst_14 {dimension_numbers = #tpu.dot_dimension_numbers<[1], [1], [0], [0], [0, 0, 1, 0], [], []>} : vector<8x8xf32>, vector<8x8xf32>, vector<8x8xf32> -> vector<8x8xf32>
    %cst_15 = arith.constant 0.353553385 : f32
    %35 = vector.broadcast %cst_15 : f32 to vector<8x8xf32>
    %36 = arith.mulf %34, %35 : vector<8x8xf32>
    %cst_16 = arith.constant dense<0xFF800000> : vector<8xf32>
    %37 = vector.multi_reduction <maximumf>, %36, %cst_16 [1] : vector<8x8xf32> to vector<8xf32>
    %38 = vector.shape_cast %37 : vector<8xf32> to vector<8x1xf32>
    %39 = vector.broadcast %38 : vector<8x1xf32> to vector<8x8xf32>
    %40 = arith.subf %36, %39 : vector<8x8xf32>
    %41 = math.exp %40 : vector<8x8xf32>
    %cst_17 = arith.constant dense<0.000000e+00> : vector<8xf32>
    %42 = vector.multi_reduction <add>, %41, %cst_17 [1] : vector<8x8xf32> to vector<8xf32>
    %43 = vector.shape_cast %42 : vector<8xf32> to vector<8x1xf32>
    %44 = tpu.reciprocal %43 {approx = true} : vector<8x1xf32> -> vector<8x1xf32>
    %45 = vector.broadcast %44 : vector<8x1xf32> to vector<8x8xf32>
    %46 = arith.mulf %41, %45 : vector<8x8xf32>
    %cst_18 = arith.constant dense<0.000000e+00> : vector<8x8xf32>
    %47 = tpu.matmul %46, %33, %cst_18 {dimension_numbers = #tpu.dot_dimension_numbers<[1], [0], [0], [1], [0, 0, 1, 1], [], []>} : vector<8x8xf32>, vector<8x8xf32>, vector<8x8xf32> -> vector<8x8xf32>
    %c8_19 = arith.constant 8 : index
    %c0_20 = arith.constant 0 : index
    %48 = vector.load %arg5[%c8_19, %c0_20] : memref<32x32xf32, #tpu.memory_space<vmem>>, vector<8x32xf32>
    %cst_21 = arith.constant dense<0.000000e+00> : vector<8x32xf32>
    %49 = tpu.matmul %47, %48, %cst_21 {dimension_numbers = #tpu.dot_dimension_numbers<[1], [0], [0], [1], [0, 0, 1, 1], [], []>} : vector<8x8xf32>, vector<8x32xf32>, vector<8x32xf32> -> vector<8x32xf32>
    %50 = arith.addf %29, %49 : vector<8x32xf32>
    %51 = arith.index_cast %4 : i32 to index
    %c16 = arith.constant 16 : index
    %52 = vector.load %arg11[%51, %c16] : memref<8x96xf32, #tpu.memory_space<vmem>>, vector<8x8xf32>
    %c0_22 = arith.constant 0 : index
    %c48 = arith.constant 48 : index
    %53 = vector.load %arg11[%c0_22, %c48] : memref<8x96xf32, #tpu.memory_space<vmem>>, vector<8x8xf32>
    %c0_23 = arith.constant 0 : index
    %c80 = arith.constant 80 : index
    %54 = vector.load %arg11[%c0_23, %c80] : memref<8x96xf32, #tpu.memory_space<vmem>>, vector<8x8xf32>
    %cst_24 = arith.constant dense<0.000000e+00> : vector<8x8xf32>
    %55 = tpu.matmul %52, %53, %cst_24 {dimension_numbers = #tpu.dot_dimension_numbers<[1], [1], [0], [0], [0, 0, 1, 0], [], []>} : vector<8x8xf32>, vector<8x8xf32>, vector<8x8xf32> -> vector<8x8xf32>
    %cst_25 = arith.constant 0.353553385 : f32
    %56 = vector.broadcast %cst_25 : f32 to vector<8x8xf32>
    %57 = arith.mulf %55, %56 : vector<8x8xf32>
    %cst_26 = arith.constant dense<0xFF800000> : vector<8xf32>
    %58 = vector.multi_reduction <maximumf>, %57, %cst_26 [1] : vector<8x8xf32> to vector<8xf32>
    %59 = vector.shape_cast %58 : vector<8xf32> to vector<8x1xf32>
    %60 = vector.broadcast %59 : vector<8x1xf32> to vector<8x8xf32>
    %61 = arith.subf %57, %60 : vector<8x8xf32>
    %62 = math.exp %61 : vector<8x8xf32>
    %cst_27 = arith.constant dense<0.000000e+00> : vector<8xf32>
    %63 = vector.multi_reduction <add>, %62, %cst_27 [1] : vector<8x8xf32> to vector<8xf32>
    %64 = vector.shape_cast %63 : vector<8xf32> to vector<8x1xf32>
    %65 = tpu.reciprocal %64 {approx = true} : vector<8x1xf32> -> vector<8x1xf32>
    %66 = vector.broadcast %65 : vector<8x1xf32> to vector<8x8xf32>
    %67 = arith.mulf %62, %66 : vector<8x8xf32>
    %cst_28 = arith.constant dense<0.000000e+00> : vector<8x8xf32>
    %68 = tpu.matmul %67, %54, %cst_28 {dimension_numbers = #tpu.dot_dimension_numbers<[1], [0], [0], [1], [0, 0, 1, 1], [], []>} : vector<8x8xf32>, vector<8x8xf32>, vector<8x8xf32> -> vector<8x8xf32>
    %c16_29 = arith.constant 16 : index
    %c0_30 = arith.constant 0 : index
    %69 = vector.load %arg5[%c16_29, %c0_30] : memref<32x32xf32, #tpu.memory_space<vmem>>, vector<8x32xf32>
    %cst_31 = arith.constant dense<0.000000e+00> : vector<8x32xf32>
    %70 = tpu.matmul %68, %69, %cst_31 {dimension_numbers = #tpu.dot_dimension_numbers<[1], [0], [0], [1], [0, 0, 1, 1], [], []>} : vector<8x8xf32>, vector<8x32xf32>, vector<8x32xf32> -> vector<8x32xf32>
    %71 = arith.addf %50, %70 : vector<8x32xf32>
    %72 = arith.index_cast %4 : i32 to index
    %c24 = arith.constant 24 : index
    %73 = vector.load %arg11[%72, %c24] : memref<8x96xf32, #tpu.memory_space<vmem>>, vector<8x8xf32>
    %c0_32 = arith.constant 0 : index
    %c56 = arith.constant 56 : index
    %74 = vector.load %arg11[%c0_32, %c56] : memref<8x96xf32, #tpu.memory_space<vmem>>, vector<8x8xf32>
    %c0_33 = arith.constant 0 : index
    %c88 = arith.constant 88 : index
    %75 = vector.load %arg11[%c0_33, %c88] : memref<8x96xf32, #tpu.memory_space<vmem>>, vector<8x8xf32>
    %cst_34 = arith.constant dense<0.000000e+00> : vector<8x8xf32>
    %76 = tpu.matmul %73, %74, %cst_34 {dimension_numbers = #tpu.dot_dimension_numbers<[1], [1], [0], [0], [0, 0, 1, 0], [], []>} : vector<8x8xf32>, vector<8x8xf32>, vector<8x8xf32> -> vector<8x8xf32>
    %cst_35 = arith.constant 0.353553385 : f32
    %77 = vector.broadcast %cst_35 : f32 to vector<8x8xf32>
    %78 = arith.mulf %76, %77 : vector<8x8xf32>
    %cst_36 = arith.constant dense<0xFF800000> : vector<8xf32>
    %79 = vector.multi_reduction <maximumf>, %78, %cst_36 [1] : vector<8x8xf32> to vector<8xf32>
    %80 = vector.shape_cast %79 : vector<8xf32> to vector<8x1xf32>
    %81 = vector.broadcast %80 : vector<8x1xf32> to vector<8x8xf32>
    %82 = arith.subf %78, %81 : vector<8x8xf32>
    %83 = math.exp %82 : vector<8x8xf32>
    %cst_37 = arith.constant dense<0.000000e+00> : vector<8xf32>
    %84 = vector.multi_reduction <add>, %83, %cst_37 [1] : vector<8x8xf32> to vector<8xf32>
    %85 = vector.shape_cast %84 : vector<8xf32> to vector<8x1xf32>
    %86 = tpu.reciprocal %85 {approx = true} : vector<8x1xf32> -> vector<8x1xf32>
    %87 = vector.broadcast %86 : vector<8x1xf32> to vector<8x8xf32>
    %88 = arith.mulf %83, %87 : vector<8x8xf32>
    %cst_38 = arith.constant dense<0.000000e+00> : vector<8x8xf32>
    %89 = tpu.matmul %88, %75, %cst_38 {dimension_numbers = #tpu.dot_dimension_numbers<[1], [0], [0], [1], [0, 0, 1, 1], [], []>} : vector<8x8xf32>, vector<8x8xf32>, vector<8x8xf32> -> vector<8x8xf32>
    %c24_39 = arith.constant 24 : index
    %c0_40 = arith.constant 0 : index
    %90 = vector.load %arg5[%c24_39, %c0_40] : memref<32x32xf32, #tpu.memory_space<vmem>>, vector<8x32xf32>
    %cst_41 = arith.constant dense<0.000000e+00> : vector<8x32xf32>
    %91 = tpu.matmul %89, %90, %cst_41 {dimension_numbers = #tpu.dot_dimension_numbers<[1], [0], [0], [1], [0, 0, 1, 1], [], []>} : vector<8x8xf32>, vector<8x32xf32>, vector<8x32xf32> -> vector<8x32xf32>
    %92 = arith.addf %71, %91 : vector<8x32xf32>
    %c0_42 = arith.constant 0 : index
    %c0_43 = arith.constant 0 : index
    %c0_44 = arith.constant 0 : index
    %93 = vector.load %arg10[%c0_42, %c0_43, %c0_44] : memref<1x8x32xf32, #tpu.memory_space<vmem>>, vector<1x8x32xf32>
    %94 = vector.shape_cast %93 : vector<1x8x32xf32> to vector<8x32xf32>
    %95 = vector.shape_cast %92 : vector<8x32xf32> to vector<1x8x32xf32>
    tpu.vector_store %arg10[%c0_42, %c0_43, %c0_44], %95 {strides = array<i32>} : memref<1x8x32xf32, #tpu.memory_space<vmem>>, vector<1x8x32xf32>,
    %c0_45 = arith.constant 0 : index
    %96 = arith.index_cast %4 : i32 to index
    %c0_46 = arith.constant 0 : index
    %97 = vector.load %arg2[%c0_45, %96, %c0_46] : memref<1x8x32xf32, #tpu.memory_space<vmem>>, vector<1x8x32xf32>
    %98 = vector.shape_cast %97 : vector<1x8x32xf32> to vector<8x32xf32>
    %99 = arith.addf %92, %98 : vector<8x32xf32>
    %cst_47 = arith.constant dense<0.000000e+00> : vector<8xf32>
    %100 = vector.multi_reduction <add>, %99, %cst_47 [1] : vector<8x32xf32> to vector<8xf32>
    %101 = vector.shape_cast %100 : vector<8xf32> to vector<8x1xf32>
    %cst_48 = arith.constant 3.200000e+01 : f32
    %102 = vector.broadcast %cst_48 : f32 to vector<8x1xf32>
    %103 = arith.divf %101, %102 : vector<8x1xf32>
    %104 = vector.broadcast %103 : vector<8x1xf32> to vector<8x32xf32>
    %105 = arith.subf %99, %104 : vector<8x32xf32>
    %106 = arith.mulf %105, %105 : vector<8x32xf32>
    %cst_49 = arith.constant dense<0.000000e+00> : vector<8xf32>
    %107 = vector.multi_reduction <add>, %106, %cst_49 [1] : vector<8x32xf32> to vector<8xf32>
    %108 = vector.shape_cast %107 : vector<8xf32> to vector<8x1xf32>
    %cst_50 = arith.constant 3.200000e+01 : f32
    %109 = vector.broadcast %cst_50 : f32 to vector<8x1xf32>
    %110 = arith.divf %108, %109 : vector<8x1xf32>
    %cst_51 = arith.constant 9.99999974E-6 : f32
    %111 = vector.broadcast %cst_51 : f32 to vector<8x1xf32>
    %112 = arith.addf %110, %111 : vector<8x1xf32>
    %113 = math.rsqrt %112 : vector<8x1xf32>
    %114 = vector.broadcast %113 : vector<8x1xf32> to vector<8x32xf32>
    %115 = arith.mulf %105, %114 : vector<8x32xf32>
    %c0_52 = arith.constant 0 : index
    %c0_53 = arith.constant 0 : index
    %116 = vector.load %arg7[%c0_52, %c0_53] : memref<1x32xf32, #tpu.memory_space<vmem>>, vector<1x32xf32>
    %117 = vector.shape_cast %116 : vector<1x32xf32> to vector<32xf32>
    %118 = vector.shape_cast %117 : vector<32xf32> to vector<1x32xf32>
    %119 = vector.broadcast %118 : vector<1x32xf32> to vector<8x32xf32>
    %120 = arith.mulf %115, %119 : vector<8x32xf32>
    %c0_54 = arith.constant 0 : index
    %c0_55 = arith.constant 0 : index
    %121 = vector.load %arg8[%c0_54, %c0_55] : memref<1x32xf32, #tpu.memory_space<vmem>>, vector<1x32xf32>
    %122 = vector.shape_cast %121 : vector<1x32xf32> to vector<32xf32>
    %123 = vector.shape_cast %122 : vector<32xf32> to vector<1x32xf32>
    %124 = vector.broadcast %123 : vector<1x32xf32> to vector<8x32xf32>
    %125 = arith.addf %120, %124 : vector<8x32xf32>
    %c0_56 = arith.constant 0 : index
    %c0_57 = arith.constant 0 : index
    %c0_58 = arith.constant 0 : index
    %126 = vector.load %arg9[%c0_56, %c0_57, %c0_58] : memref<1x8x32xf32, #tpu.memory_space<vmem>>, vector<1x8x32xf32>
    %127 = vector.shape_cast %126 : vector<1x8x32xf32> to vector<8x32xf32>
    %128 = vector.shape_cast %125 : vector<8x32xf32> to vector<1x8x32xf32>
    tpu.vector_store %arg9[%c0_56, %c0_57, %c0_58], %128 {strides = array<i32>} : memref<1x8x32xf32, #tpu.memory_space<vmem>>, vector<1x8x32xf32>,
    return
  }
  func.func @transform_0(%arg0: i32, %arg1: i32) -> (i32, i32, i32) {
    %c0_i32 = arith.constant 0 : i32
    %c0_i32_0 = arith.constant 0 : i32
    %c0_i32_1 = arith.constant 0 : i32
    return %arg0, %c0_i32, %c0_i32_0 : i32, i32, i32
  }
  func.func @transform_1(%arg0: i32, %arg1: i32) -> (i32, i32) {
    %c0_i32 = arith.constant 0 : i32
    %c0_i32_0 = arith.constant 0 : i32
    %c0_i32_1 = arith.constant 0 : i32
    return %c0_i32, %c0_i32_0 : i32, i32
  }
  func.func @transform_2(%arg0: i32, %arg1: i32) -> (i32, i32) {
    %c0_i32 = arith.constant 0 : i32
    %c0_i32_0 = arith.constant 0 : i32
    %c0_i32_1 = arith.constant 0 : i32
    return %c0_i32, %c0_i32_0 : i32, i32
  }
  func.func @transform_3(%arg0: i32, %arg1: i32) -> (i32, i32) {
    %c0_i32 = arith.constant 0 : i32
    %c0_i32_0 = arith.constant 0 : i32
    %c0_i32_1 = arith.constant 0 : i32
    return %c0_i32, %c0_i32_0 : i32, i32
  }
  func.func @transform_4(%arg0: i32, %arg1: i32) -> (i32, i32) {
    %c0_i32 = arith.constant 0 : i32
    %c0_i32_0 = arith.constant 0 : i32
    %c0_i32_1 = arith.constant 0 : i32
    return %c0_i32, %c0_i32_0 : i32, i32
  }
  func.func @transform_5(%arg0: i32, %arg1: i32) -> (i32, i32) {
    %c0_i32 = arith.constant 0 : i32
    %c0_i32_0 = arith.constant 0 : i32
    %c0_i32_1 = arith.constant 0 : i32
    return %c0_i32, %c0_i32_0 : i32, i32
  }
  func.func @transform_6(%arg0: i32, %arg1: i32) -> (i32, i32) {
    %c0_i32 = arith.constant 0 : i32
    %c0_i32_0 = arith.constant 0 : i32
    %c0_i32_1 = arith.constant 0 : i32
    return %c0_i32, %c0_i32_0 : i32, i32
  }
  func.func @transform_7(%arg0: i32, %arg1: i32) -> (i32, i32, i32) {
    %c0_i32 = arith.constant 0 : i32
    %c0_i32_0 = arith.constant 0 : i32
    return %arg0, %arg1, %c0_i32 : i32, i32, i32
  }
  func.func @transform_8(%arg0: i32, %arg1: i32) -> (i32, i32, i32) {
    %c0_i32 = arith.constant 0 : i32
    %c0_i32_0 = arith.constant 0 : i32
    return %arg0, %arg1, %c0_i32 : i32, i32, i32
  }
}

</mosaic_0001>

<llo_original>
// kernel: tpu_custom_call.1
$region0: #{tpu_custom_call.1}
  #allocation0 [shape = 'u32[]', space=smem, size = 0x4, offset = 0x4, fixed_abs, tag = 'smem constant byte address 0x4 - core index']
  #allocation1 [shape = 'u32[144,128]{1,0:T(1,128)}', space=vmem, size = 0x12000, scoped, tag = 'internal scratch']
  #allocation2 [shape = 'f32[8,96]{1,0:T(8,128)}', space=vmem, size = 0x1000, scoped, tag = 'scratch operand']
  %s0 = inlined_call_operand.hbm [shape: f32[2,8,32], index: 0, kind: input, shape index: {}]
  %s1 = inlined_call_operand.hbm [shape: f32[32,96], index: 1, kind: input, shape index: {}]
  %s2 = inlined_call_operand.hbm [shape: f32[1,96], index: 2, kind: input, shape index: {}]
  %s3 = inlined_call_operand.hbm [shape: f32[32,32], index: 3, kind: input, shape index: {}]
  %s4 = inlined_call_operand.hbm [shape: f32[1,32], index: 4, kind: input, shape index: {}]
  %s5 = inlined_call_operand.hbm [shape: f32[1,32], index: 5, kind: input, shape index: {}]
  %s6 = inlined_call_operand.hbm [shape: f32[1,32], index: 6, kind: input, shape index: {}]
  %s7 = inlined_call_operand.hbm [shape: f32[2,8,32], index: 7, kind: output, shape index: {0}]
  %s8 = inlined_call_operand.hbm [shape: f32[2,8,32], index: 8, kind: output, shape index: {1}]
  %9 = xla_tuple %s7, %s8
  %s10 = sld [smem:[#allocation0]]
  $region101: #{tpu_custom_call.1} parent=0
    _
  %s12 = ssub.s32 1, %s10
  %s13 = scalar_select 0, %s12, %s10
  $region1: #{tpu_custom_call.1} parent=0
    #allocation3 [shape = 'u8[8192]{0}', space=vmem, size = 0x2000, scoped, tag = 'input window, operand 0']
    #allocation4 [shape = 's32[2]{0}', space=sflag, size = 0x8, scoped, tag = 'scoped memory for tpu_custom_call.1']
    #allocation5 [shape = 's32[2]{0}', space=sflag, size = 0x8, scoped, tag = 'scoped memory for tpu_custom_call.1']
    #allocation6 [shape = 'u8[16384]{0}', space=vmem, size = 0x4000, scoped, tag = 'input window, operand 1, single buffered']
    #allocation7 [shape = 's32[1]{0}', space=sflag, size = 0x4, scoped, tag = 'scoped memory for tpu_custom_call.1']
    #allocation8 [shape = 'u8[512]{0}', space=vmem, size = 0x400, scoped, tag = 'input window, operand 2, single buffered']
    #allocation9 [shape = 'u8[16384]{0}', space=vmem, size = 0x4000, scoped, tag = 'input window, operand 3, single buffered']
    #allocation10 [shape = 's32[1]{0}', space=sflag, size = 0x4, scoped, tag = 'scoped memory for tpu_custom_call.1']
    #allocation11 [shape = 'u8[512]{0}', space=vmem, size = 0x400, scoped, tag = 'input window, operand 4, single buffered']
    #allocation12 [shape = 'u8[512]{0}', space=vmem, size = 0x400, scoped, tag = 'input window, operand 5, single buffered']
    #allocation13 [shape = 's32[1]{0}', space=sflag, size = 0x4, scoped, tag = 'scoped memory for tpu_custom_call.1']
    #allocation14 [shape = 'u8[512]{0}', space=vmem, size = 0x400, scoped, tag = 'input window, operand 6, single buffered']
    #allocation15 [shape = 'u8[8192]{0}', space=vmem, size = 0x2000, scoped, tag = 'output window, operand 0']
    #allocation16 [shape = 'u8[8192]{0}', space=vmem, size = 0x2000, scoped, tag = 'output window, operand 1']
    #allocation17 [shape = 's32[2]{0}', space=sflag, size = 0x8, scoped, tag = 'scoped memory for tpu_custom_call.1']
    %14 = vsyncpa [#allocation4], 0
    %s15 = scalar_lea.sflag [#allocation4], 1
    %16 = vsyncpa %s15, 0
    %17 = vsyncpa [#allocation7], 0
    %18 = vsyncpa [#allocation10], 0
    %19 = vsyncpa [#allocation13], 0
    %20 = vsyncpa [#allocation5], 0
    %s21 = scalar_lea.sflag [#allocation5], 1
    %22 = vsyncpa %s21, 0
    %23 = vsyncpa [#allocation17], 0
    %s24 = scalar_lea.sflag [#allocation17], 1
    %25 = vsyncpa %s24, 0
    loop: start=0, step=1, limit=4
    $region2: #{tpu_custom_call.1} parent=1 // loop_pre_header
      _
    $region3: #{tpu_custom_call.1} parent=1 // loop_header
      %s27 = sphi 0, %s31
      %p28 = scmp.ge.s32.totalorder %s27, 4
      %s34 = sphi 0, %s46
      %s35 = sphi 0, %s42
      %s36 = sphi 0, %s34
      %s37 = sphi 0, %s35
      %s38 = sphi 0, %s36
      %s39 = sphi 0, %s37
      %s49 = sphi 0, %s51
      %s52 = sphi 0, %s49
      %s53 = sphi 0, %s52
      %s69 = sphi 0, %s53
      %s73 = sphi 0, %s73
      %s75 = sphi 0, %s73
      %s76 = sphi 0, %s75
      %s90 = sphi 0, %s76
      %s94 = sphi 0, %s94
      %s96 = sphi 0, %s94
      %s97 = sphi 0, %s96
      %s111 = sphi 0, %s97
      %s115 = sphi 0, %s115
      %s117 = sphi 0, %s115
      %s118 = sphi 0, %s117
      %s132 = sphi 0, %s118
      %s136 = sphi 0, %s136
      %s138 = sphi 0, %s136
      %s139 = sphi 0, %s138
      %s153 = sphi 0, %s139
      %s157 = sphi 0, %s157
      %s159 = sphi 0, %s157
      %s160 = sphi 0, %s159
      %s174 = sphi 0, %s160
      %s178 = sphi 0, %s178
      %s180 = sphi 0, %s178
      %s181 = sphi 0, %s180
      %s195 = sphi 0, %s181
      %s203 = sphi 0, %s205
      %s206 = sphi 0, %s203
      %s207 = sphi 0, %s206
      %s223 = sphi 0, %s207
      %s231 = sphi 0, %s233
      %s234 = sphi 0, %s231
      %s235 = sphi 0, %s234
      %s251 = sphi 0, %s235
    $region4: #{tpu_custom_call.1} parent=1 // loop_header_branch
      %30 = sbr.rel (%p28) target = $region8
    $region5: #{tpu_custom_call.1} parent=1 // loop_body
      %s32 = ssub.s32 %s27, 1
      %s33 = ssub.s32 %s27, 2
      %s40 = sadd.s32 1, %s35
      %p41 = scmp.ge.s32.totalorder %s40, 1
      %s42 = scalar_select %p41, 0, %s40
      %s43 = sadd.s32 1, %s34
      %s44 = scalar_select %p41, %s43, %s34
      %p45 = scmp.ge.s32.totalorder %s44, 2
      %s46 = scalar_select %p45, 0, %s44
      %s47 = ssub.s32 %s34, %s46
      %p48 = scmp.eq.s32.totalorder %s47, 0
      %s50 = sadd.s32 %s49, 1
      %s51 = scalar_select %p48, %s49, %s50
      %p54 = pneg %p48
      %p55 = scmp.eq.s32.totalorder %s27, 1
      %p56 = por %p54, %p55
      %p57 = scmp.ne.s32.totalorder %s49, %s52
      %p58 = scmp.eq.s32.totalorder %s27, 0
      %p59 = por %p57, %p58
      %p60 = scmp.ne.s32.totalorder %s49, %s52
      %p61 = scmp.eq.s32.totalorder %s32, 1
      %p62 = por %p60, %p61
      %p63 = scmp.ne.s32.totalorder %s52, %s53
      %p64 = scmp.eq.s32.totalorder %s32, 0
      %p65 = por %p63, %p64
      %p66 = scmp.ne.s32.totalorder %s52, %s53
      %p67 = scmp.eq.s32.totalorder %s33, 1
      %p68 = por %p66, %p67
      %p70 = scmp.ne.s32.totalorder %s53, %s69
      %p71 = scmp.eq.s32.totalorder %s33, 0
      %p72 = por %p70, %p71
      %s74 = sadd.s32 %s73, 1
      %p77 = scmp.eq.s32.totalorder %s27, 1
      %p78 = scmp.ne.s32.totalorder %s73, %s75
      %p79 = scmp.eq.s32.totalorder %s27, 0
      %p80 = por %p78, %p79
      %p81 = scmp.ne.s32.totalorder %s73, %s75
      %p82 = scmp.eq.s32.totalorder %s32, 1
      %p83 = por %p81, %p82
      %p84 = scmp.ne.s32.totalorder %s75, %s76
      %p85 = scmp.eq.s32.totalorder %s32, 0
      %p86 = por %p84, %p85
      %p87 = scmp.ne.s32.totalorder %s75, %s76
      %p88 = scmp.eq.s32.totalorder %s33, 1
      %p89 = por %p87, %p88
      %p91 = scmp.ne.s32.totalorder %s76, %s90
      %p92 = scmp.eq.s32.totalorder %s33, 0
      %p93 = por %p91, %p92
      %s95 = sadd.s32 %s94, 1
      %p98 = scmp.eq.s32.totalorder %s27, 1
      %p99 = scmp.ne.s32.totalorder %s94, %s96
      %p100 = scmp.eq.s32.totalorder %s27, 0
      %p101 = por %p99, %p100
      %p102 = scmp.ne.s32.totalorder %s94, %s96
      %p103 = scmp.eq.s32.totalorder %s32, 1
      %p104 = por %p102, %p103
      %p105 = scmp.ne.s32.totalorder %s96, %s97
      %p106 = scmp.eq.s32.totalorder %s32, 0
      %p107 = por %p105, %p106
      %p108 = scmp.ne.s32.totalorder %s96, %s97
      %p109 = scmp.eq.s32.totalorder %s33, 1
      %p110 = por %p108, %p109
      %p112 = scmp.ne.s32.totalorder %s97, %s111
      %p113 = scmp.eq.s32.totalorder %s33, 0
      %p114 = por %p112, %p113
      %s116 = sadd.s32 %s115, 1
      %p119 = scmp.eq.s32.totalorder %s27, 1
      %p120 = scmp.ne.s32.totalorder %s115, %s117
      %p121 = scmp.eq.s32.totalorder %s27, 0
      %p122 = por %p120, %p121
      %p123 = scmp.ne.s32.totalorder %s115, %s117
      %p124 = scmp.eq.s32.totalorder %s32, 1
      %p125 = por %p123, %p124
      %p126 = scmp.ne.s32.totalorder %s117, %s118
      %p127 = scmp.eq.s32.totalorder %s32, 0
      %p128 = por %p126, %p127
      %p129 = scmp.ne.s32.totalorder %s117, %s118
      %p130 = scmp.eq.s32.totalorder %s33, 1
      %p131 = por %p129, %p130
      %p133 = scmp.ne.s32.totalorder %s118, %s132
      %p134 = scmp.eq.s32.totalorder %s33, 0
      %p135 = por %p133, %p134
      %s137 = sadd.s32 %s136, 1
      %p140 = scmp.eq.s32.totalorder %s27, 1
      %p141 = scmp.ne.s32.totalorder %s136, %s138
      %p142 = scmp.eq.s32.totalorder %s27, 0
      %p143 = por %p141, %p142
      %p144 = scmp.ne.s32.totalorder %s136, %s138
      %p145 = scmp.eq.s32.totalorder %s32, 1
      %p146 = por %p144, %p145
      %p147 = scmp.ne.s32.totalorder %s138, %s139
      %p148 = scmp.eq.s32.totalorder %s32, 0
      %p149 = por %p147, %p148
      %p150 = scmp.ne.s32.totalorder %s138, %s139
      %p151 = scmp.eq.s32.totalorder %s33, 1
      %p152 = por %p150, %p151
      %p154 = scmp.ne.s32.totalorder %s139, %s153
      %p155 = scmp.eq.s32.totalorder %s33, 0
      %p156 = por %p154, %p155
      %s158 = sadd.s32 %s157, 1
      %p161 = scmp.eq.s32.totalorder %s27, 1
      %p162 = scmp.ne.s32.totalorder %s157, %s159
      %p163 = scmp.eq.s32.totalorder %s27, 0
      %p164 = por %p162, %p163
      %p165 = scmp.ne.s32.totalorder %s157, %s159
      %p166 = scmp.eq.s32.totalorder %s32, 1
      %p167 = por %p165, %p166
      %p168 = scmp.ne.s32.totalorder %s159, %s160
      %p169 = scmp.eq.s32.totalorder %s32, 0
      %p170 = por %p168, %p169
      %p171 = scmp.ne.s32.totalorder %s159, %s160
      %p172 = scmp.eq.s32.totalorder %s33, 1
      %p173 = por %p171, %p172
      %p175 = scmp.ne.s32.totalorder %s160, %s174
      %p176 = scmp.eq.s32.totalorder %s33, 0
      %p177 = por %p175, %p176
      %s179 = sadd.s32 %s178, 1
      %p182 = scmp.eq.s32.totalorder %s27, 1
      %p183 = scmp.ne.s32.totalorder %s178, %s180
      %p184 = scmp.eq.s32.totalorder %s27, 0
      %p185 = por %p183, %p184
      %p186 = scmp.ne.s32.totalorder %s178, %s180
      %p187 = scmp.eq.s32.totalorder %s32, 1
      %p188 = por %p186, %p187
      %p189 = scmp.ne.s32.totalorder %s180, %s181
      %p190 = scmp.eq.s32.totalorder %s32, 0
      %p191 = por %p189, %p190
      %p192 = scmp.ne.s32.totalorder %s180, %s181
      %p193 = scmp.eq.s32.totalorder %s33, 1
      %p194 = por %p192, %p193
      %p196 = scmp.ne.s32.totalorder %s181, %s195
      %p197 = scmp.eq.s32.totalorder %s33, 0
      %p198 = por %p196, %p197
      %s199 = ssub.s32 %s34, %s46
      %s200 = ssub.s32 %s35, %s42
      %s201 = sor.u32 %s199, %s200
      %p202 = scmp.eq.s32.totalorder %s201, 0
      %s204 = sadd.s32 %s203, 1
      %s205 = scalar_select %p202, %s203, %s204
      %p208 = pneg %p202
      %p209 = scmp.eq.s32.totalorder %s27, 1
      %p210 = por %p208, %p209
      %p211 = scmp.ne.s32.totalorder %s203, %s206
      %p212 = scmp.eq.s32.totalorder %s27, 0
      %p213 = por %p211, %p212
      %p214 = scmp.ne.s32.totalorder %s203, %s206
      %p215 = scmp.eq.s32.totalorder %s32, 1
      %p216 = por %p214, %p215
      %p217 = scmp.ne.s32.totalorder %s206, %s207
      %p218 = scmp.eq.s32.totalorder %s32, 0
      %p219 = por %p217, %p218
      %p220 = scmp.ne.s32.totalorder %s206, %s207
      %p221 = scmp.eq.s32.totalorder %s33, 1
      %p222 = por %p220, %p221
      %p224 = scmp.ne.s32.totalorder %s207, %s223
      %p225 = scmp.eq.s32.totalorder %s33, 0
      %p226 = por %p224, %p225
      %s227 = ssub.s32 %s34, %s46
      %s228 = ssub.s32 %s35, %s42
      %s229 = sor.u32 %s227, %s228
      %p230 = scmp.eq.s32.totalorder %s229, 0
      %s232 = sadd.s32 %s231, 1
      %s233 = scalar_select %p230, %s231, %s232
      %p236 = pneg %p230
      %p237 = scmp.eq.s32.totalorder %s27, 1
      %p238 = por %p236, %p237
      %p239 = scmp.ne.s32.totalorder %s231, %s234
      %p240 = scmp.eq.s32.totalorder %s27, 0
      %p241 = por %p239, %p240
      %p242 = scmp.ne.s32.totalorder %s231, %s234
      %p243 = scmp.eq.s32.totalorder %s32, 1
      %p244 = por %p242, %p243
      %p245 = scmp.ne.s32.totalorder %s234, %s235
      %p246 = scmp.eq.s32.totalorder %s32, 0
      %p247 = por %p245, %p246
      %p248 = scmp.ne.s32.totalorder %s234, %s235
      %p249 = scmp.eq.s32.totalorder %s33, 1
      %p250 = por %p248, %p249
      %p252 = scmp.ne.s32.totalorder %s235, %s251
      %p253 = scmp.eq.s32.totalorder %s33, 0
      %p254 = por %p252, %p253
      %p255 = scmp.le.s32.totalorder 1, %s27
      %p256 = scmp.lt.s32.totalorder %s27, 3
      %p257 = pnand %p255, %p256
      %p258 = pneg %p257
      // Predicated region
      $region9: #{tpu_custom_call.1} parent=5 // pred_check
        _
      $region10: #{tpu_custom_call.1} parent=5 // pred_check_branch
        %260 = sbr.rel (%p257) target = $region12
      $region11: #{tpu_custom_call.1} parent=5 // pred_region
        %s261 = ssub.s32 %s27, 1
        // Predicated region
        $region13: #{tpu_custom_call.1} parent=11 // pred_check
          %p262 = pneg %p86
        $region14: #{tpu_custom_call.1} parent=11 // pred_check_branch
          %264 = sbr.rel (%p262) target = $region16
        $region15: #{tpu_custom_call.1} parent=11 // pred_region
          %s266 = ssub.s32 512, 512
          %267 = vsyncadd [#allocation7], %s266
          %s268 = sshll.u32 [#allocation6], 4
          %s269 = int_to_ptr.vmem [resolvable:$true] %s268
          %274 = dma.hbm_to_vmem [thread:$0]  %s1, 512, %s269, [#allocation7], 128, 128, 8
        $region16: #{tpu_custom_call.1} parent=11 // pred_fallthru
          _
        // Predicated region
        $region17: #{tpu_custom_call.1} parent=11 // pred_check
          %p275 = pneg %p107
        $region18: #{tpu_custom_call.1} parent=11 // pred_check_branch
          %277 = sbr.rel (%p275) target = $region20
        $region19: #{tpu_custom_call.1} parent=11 // pred_region
          %s279 = ssub.s32 16, 16
          %280 = vsyncadd [#allocation7], %s279
          %s282 = sshll.u32 [#allocation8], 4
          %s283 = int_to_ptr.vmem [resolvable:$true] %s282
          %285 = dma.hbm_to_vmem [thread:$0]  %s2, 16, %s283, [#allocation7]
        $region20: #{tpu_custom_call.1} parent=11 // pred_fallthru
          _
        // Predicated region
        $region21: #{tpu_custom_call.1} parent=11 // pred_check
          %p286 = pneg %p128
        $region22: #{tpu_custom_call.1} parent=11 // pred_check_branch
          %288 = sbr.rel (%p286) target = $region24
        $region23: #{tpu_custom_call.1} parent=11 // pred_region
          %s290 = ssub.s32 512, 512
          %291 = vsyncadd [#allocation10], %s290
          %s292 = sshll.u32 [#allocation9], 4
          %s293 = int_to_ptr.vmem [resolvable:$true] %s292
          %298 = dma.hbm_to_vmem [thread:$0]  %s3, 512, %s293, [#allocation10], 128, 128, 8
        $region24: #{tpu_custom_call.1} parent=11 // pred_fallthru
          _
        // Predicated region
        $region25: #{tpu_custom_call.1} parent=11 // pred_check
          %p299 = pneg %p149
        $region26: #{tpu_custom_call.1} parent=11 // pred_check_branch
          %301 = sbr.rel (%p299) target = $region28
        $region27: #{tpu_custom_call.1} parent=11 // pred_region
          %s303 = ssub.s32 16, 16
          %304 = vsyncadd [#allocation10], %s303
          %s306 = sshll.u32 [#allocation11], 4
          %s307 = int_to_ptr.vmem [resolvable:$true] %s306
          %309 = dma.hbm_to_vmem [thread:$0]  %s4, 16, %s307, [#allocation10]
        $region28: #{tpu_custom_call.1} parent=11 // pred_fallthru
          _
        // Predicated region
        $region29: #{tpu_custom_call.1} parent=11 // pred_check
          %p310 = pneg %p170
        $region30: #{tpu_custom_call.1} parent=11 // pred_check_branch
          %312 = sbr.rel (%p310) target = $region32
        $region31: #{tpu_custom_call.1} parent=11 // pred_region
          %s314 = ssub.s32 16, 16
          %315 = vsyncadd [#allocation13], %s314
          %s317 = sshll.u32 [#allocation12], 4
          %s318 = int_to_ptr.vmem [resolvable:$true] %s317
          %320 = dma.hbm_to_vmem [thread:$0]  %s5, 16, %s318, [#allocation13]
        $region32: #{tpu_custom_call.1} parent=11 // pred_fallthru
          _
        // Predicated region
        $region33: #{tpu_custom_call.1} parent=11 // pred_check
          %p321 = pneg %p191
        $region34: #{tpu_custom_call.1} parent=11 // pred_check_branch
          %323 = sbr.rel (%p321) target = $region36
        $region35: #{tpu_custom_call.1} parent=11 // pred_region
          %s325 = ssub.s32 16, 16
          %326 = vsyncadd [#allocation13], %s325
          %s328 = sshll.u32 [#allocation14], 4
          %s329 = int_to_ptr.vmem [resolvable:$true] %s328
          %331 = dma.hbm_to_vmem [thread:$0]  %s6, 16, %s329, [#allocation13]
        $region36: #{tpu_custom_call.1} parent=11 // pred_fallthru
          _
      $region12: #{tpu_custom_call.1} parent=5 // pred_fallthru
        _
      %p332 = scmp.lt.s32.totalorder %s27, 2
      // Predicated region
      $region37: #{tpu_custom_call.1} parent=5 // pred_check
        %p333 = pneg %p332
      $region38: #{tpu_custom_call.1} parent=5 // pred_check_branch
        %335 = sbr.rel (%p333) target = $region40
      $region39: #{tpu_custom_call.1} parent=5 // pred_region
        // Predicated region
        $region41: #{tpu_custom_call.1} parent=39 // pred_check
          %p336 = pneg %p59
        $region42: #{tpu_custom_call.1} parent=39 // pred_check_branch
          %338 = sbr.rel (%p336) target = $region44
        $region43: #{tpu_custom_call.1} parent=39 // pred_region
          %s339 = sand.u32 %s49, 1
          %s340 = scalar_lea.sflag [#allocation4], %s339
          %s341 = sand.u32 %s49, 1
          %s342 = smul.addr %s341, 8
          %s343 = scalar_lea.vmem [#allocation3], %s342
          %s345 = ssub.s32 128, 128
          %346 = vsyncadd %s340, %s345
          %s347 = smul.addr %s34, 128
          %s348 = scalar_lea.hbm %s0, %s347
          %s350 = sshll.u32 %s343, 4
          %s351 = int_to_ptr.vmem [resolvable:$true] %s350
          %353 = dma.hbm_to_vmem [thread:$0]  %s348, 128, %s351, %s340
        $region44: #{tpu_custom_call.1} parent=39 // pred_fallthru
          _
      $region40: #{tpu_custom_call.1} parent=5 // pred_fallthru
        _
      %p354 = scmp.le.s32.totalorder 1, %s27
      %p355 = scmp.lt.s32.totalorder %s27, 3
      %p356 = pnand %p354, %p355
      %p357 = pneg %p356
      // Predicated region
      $region45: #{tpu_custom_call.1} parent=5 // pred_check
        _
      $region46: #{tpu_custom_call.1} parent=5 // pred_check_branch
        %359 = sbr.rel (%p356) target = $region48
      $region47: #{tpu_custom_call.1} parent=5 // pred_region
        %s360 = ssub.s32 %s27, 1
        %s361 = sand.u32 %s52, 1
        %s362 = scalar_lea.sflag [#allocation4], %s361
        %s363 = sand.u32 %s52, 1
        %s364 = smul.addr %s363, 8
        %s365 = scalar_lea.vmem [#allocation3], %s364
        // Predicated region
        $region49: #{tpu_custom_call.1} parent=47 // pred_check
          %p366 = pneg %p65
        $region50: #{tpu_custom_call.1} parent=47 // pred_check_branch
          %368 = sbr.rel (%p366) target = $region52
        $region51: #{tpu_custom_call.1} parent=47 // pred_region
          %369 = dma.done %s362, 128
        $region52: #{tpu_custom_call.1} parent=47 // pred_fallthru
          _
        // Predicated region
        $region53: #{tpu_custom_call.1} parent=47 // pred_check
          %p370 = pneg %p86
        $region54: #{tpu_custom_call.1} parent=47 // pred_check_branch
          %372 = sbr.rel (%p370) target = $region56
        $region55: #{tpu_custom_call.1} parent=47 // pred_region
          %373 = dma.done [#allocation7], 512
        $region56: #{tpu_custom_call.1} parent=47 // pred_fallthru
          _
        // Predicated region
        $region57: #{tpu_custom_call.1} parent=47 // pred_check
          %p374 = pneg %p107
        $region58: #{tpu_custom_call.1} parent=47 // pred_check_branch
          %376 = sbr.rel (%p374) target = $region60
        $region59: #{tpu_custom_call.1} parent=47 // pred_region
          %377 = dma.done [#allocation7], 16
        $region60: #{tpu_custom_call.1} parent=47 // pred_fallthru
          _
        // Predicated region
        $region61: #{tpu_custom_call.1} parent=47 // pred_check
          %p378 = pneg %p128
        $region62: #{tpu_custom_call.1} parent=47 // pred_check_branch
          %380 = sbr.rel (%p378) target = $region64
        $region63: #{tpu_custom_call.1} parent=47 // pred_region
          %381 = dma.done [#allocation10], 512
        $region64: #{tpu_custom_call.1} parent=47 // pred_fallthru
          _
        // Predicated region
        $region65: #{tpu_custom_call.1} parent=47 // pred_check
          %p382 = pneg %p149
        $region66: #{tpu_custom_call.1} parent=47 // pred_check_branch
          %384 = sbr.rel (%p382) target = $region68
        $region67: #{tpu_custom_call.1} parent=47 // pred_region
          %385 = dma.done [#allocation10], 16
        $region68: #{tpu_custom_call.1} parent=47 // pred_fallthru
          _
        // Predicated region
        $region69: #{tpu_custom_call.1} parent=47 // pred_check
          %p386 = pneg %p170
        $region70: #{tpu_custom_call.1} parent=47 // pred_check_branch
          %388 = sbr.rel (%p386) target = $region72
        $region71: #{tpu_custom_call.1} parent=47 // pred_region
          %389 = dma.done [#allocation13], 16
        $region72: #{tpu_custom_call.1} parent=47 // pred_fallthru
          _
        // Predicated region
        $region73: #{tpu_custom_call.1} parent=47 // pred_check
          %p390 = pneg %p191
        $region74: #{tpu_custom_call.1} parent=47 // pred_check_branch
          %392 = sbr.rel (%p390) target = $region76
        $region75: #{tpu_custom_call.1} parent=47 // pred_region
          %393 = dma.done [#allocation13], 16
        $region76: #{tpu_custom_call.1} parent=47 // pred_fallthru
          _
        %s394 = sand.u32 %s52, 1
        %s395 = scalar_lea.sflag [#allocation4], %s394
        %s396 = sand.u32 %s52, 1
        %s397 = smul.addr %s396, 8
        %s398 = scalar_lea.vmem [#allocation3], %s397
        %p399 = pneg %p65
        %p400 = pneg %p62
        %p401 = pneg %p86
        %p402 = pneg %p83
        %p403 = pneg %p107
        %p404 = pneg %p104
        %p405 = pneg %p128
        %p406 = pneg %p125
        %p407 = pneg %p149
        %p408 = pneg %p146
        %p409 = pneg %p170
        %p410 = pneg %p167
        %p411 = pneg %p191
        %p412 = pneg %p188
        %p413 = pneg %p219
        %p414 = pneg %p216
        %s415 = sand.u32 %s206, 1
        %s416 = scalar_lea.sflag [#allocation5], %s415
        %s417 = sand.u32 %s206, 1
        %s418 = smul.addr %s417, 8
        %s419 = scalar_lea.vmem [#allocation15], %s418
        %p420 = pneg %p247
        %p421 = pneg %p244
        %s422 = sand.u32 %s234, 1
        %s423 = scalar_lea.sflag [#allocation17], %s422
        %s424 = sand.u32 %s234, 1
        %s425 = smul.addr %s424, 8
        %s426 = scalar_lea.vmem [#allocation16], %s425
        %p427 = scmp.eq.s32.totalorder %s37, 0
        // Predicated region
        $region77: #{tpu_custom_call.1} parent=47 // pred_check
          %p428 = pneg %p427
        $region78: #{tpu_custom_call.1} parent=47 // pred_check_branch
          %430 = sbr.rel (%p428) target = $region80
        $region79: #{tpu_custom_call.1} parent=47 // pred_region
          %v431 = vld [vmem:[%s365] sm:$0xff]
          %v432 = vld [vmem:[#allocation6] sm:$0xff]
          %v433 = vld [vmem:[#allocation6 + $0x8] sm:$0xff]
          %v434 = vld [vmem:[#allocation6 + $0x10] sm:$0xff]
          %v435 = vld [vmem:[#allocation6 + $0x18] sm:$0xff]
          %v436 = vld [vmem:[#allocation8] sm:$0x1]
          %v438 = vlaneseq
          %v439 = vshrl.u32 %v438, 7
          %v440 = vsub.s32 0, %v439
          %v441 = vrot.slane %v436, %v440
          %vm443 = vcmask 261120
          %v445 = vsel %vm443, %v431, 0
          %447 = vmatprep.subr.mxu0 0.0
          %448 = vmatpush1.msra.mxu0 %v432
          %449 = vmatprep.subr.mxu0 0.0
          %450 = vmatpush1.msra.mxu0 %v433
          %451 = vmatprep.subr.mxu0 0.0
          %452 = vmatpush1.msra.mxu0 %v434
          %453 = vmatprep.subr.mxu0 0.0
          %454 = vmatpush1.msra.mxu0 %v435
          %455 = vmatprep.subr.mxu0 0.0
          %456 = vmatpush1.msra.mxu0 0.0
          %457 = vmatprep.subr.mxu0 0.0
          %458 = vmatpush1.msra.mxu0 0.0
          %459 = vmatprep.subr.mxu0 0.0
          %460 = vmatpush1.msra.mxu0 0.0
          %461 = vmatprep.subr.mxu0 0.0
          %462 = vmatpush1.msra.mxu0 0.0
          %463 = vmatprep.subr.mxu0 0.0
          %464 = vmatpush1.msra.mxu0 0.0
          %465 = vmatprep.subr.mxu0 0.0
          %466 = vmatpush1.msra.mxu0 0.0
          %467 = vmatprep.subr.mxu0 0.0
          %468 = vmatpush1.msra.mxu0 0.0
          %469 = vmatprep.subr.mxu0 0.0
          %470 = vmatpush1.msra.mxu0 0.0
          %471 = vmatprep.subr.mxu0 0.0
          %472 = vmatpush1.msra.mxu0 0.0
          %473 = vmatprep.subr.mxu0 0.0
          %474 = vmatpush1.msra.mxu0 0.0
          %475 = vmatprep.subr.mxu0 0.0
          %476 = vmatpush1.msra.mxu0 0.0
          %477 = vmatprep.subr.mxu0 0.0
          %478 = vmatpush1.msra.mxu0 0.0
          %479 = vmatprep.subr.mxu0 0.0
          %480 = vmatpush1.msra.mxu0 0.0
          %481 = vmatprep.subr.mxu0 0.0
          %482 = vmatpush1.msra.mxu0 0.0
          %483 = vmatprep.subr.mxu0 0.0
          %484 = vmatpush1.msra.mxu0 0.0
          %485 = vmatprep.subr.mxu0 0.0
          %486 = vmatpush1.msra.mxu0 0.0
          %487 = vmatprep.subr.mxu0 0.0
          %488 = vmatpush1.msra.mxu0 0.0
          %489 = vmatprep.subr.mxu0 0.0
          %490 = vmatpush1.msra.mxu0 0.0
          %491 = vmatprep.subr.mxu0 0.0
          %492 = vmatpush1.msra.mxu0 0.0
          %493 = vmatprep.subr.mxu0 0.0
          %494 = vmatpush1.msra.mxu0 0.0
          %495 = vmatprep.subr.mxu0 0.0
          %496 = vmatpush1.msra.mxu0 0.0
          %497 = vmatprep.subr.mxu0 0.0
          %498 = vmatpush1.msra.mxu0 0.0
          %499 = vmatprep.subr.mxu0 0.0
          %500 = vmatpush1.msra.mxu0 0.0
          %501 = vmatprep.subr.mxu0 0.0
          %502 = vmatpush1.msra.mxu0 0.0
          %503 = vmatprep.subr.mxu0 0.0
          %504 = vmatpush1.msra.mxu0 0.0
          %505 = vmatprep.subr.mxu0 0.0
          %506 = vmatpush1.msra.mxu0 0.0
          %507 = vmatprep.subr.mxu0 0.0
          %508 = vmatpush1.msra.mxu0 0.0
          %509 = vmatprep.subr.mxu0 0.0
          %510 = vmatpush1.msra.mxu0 0.0
          %511 = vmatprep.mubr.f32.mxu0 0.0
          %512 = vmatmul.mubr.f32.gmra.mrb[0].mxu0 %v445
          %v513 = vpop.f32.mrb[0].mxu0
          %v514 = vadd.f32 %v441, %v513
          %v515 = vpop.f32.mrb[0].mxu0
          %516 = vdwg.mxu0
          %vm517 = vcmask 785408
          %518 = vst.msk [vmem:[#allocation2] sm:$0xff] %vm517, %v514
        $region80: #{tpu_custom_call.1} parent=47 // pred_fallthru
          _
        %s519 = smul.u32 %s37, 8
        %v520 = vld [vmem:[#allocation11] sm:$0x1]
        %v522 = vlaneseq
        %v523 = vshrl.u32 %v522, 7
        %v524 = vsub.s32 0, %v523
        %v525 = vrot.slane %v520, %v524
        %s527 = scalar_lea.vmem [#allocation2], %s519
        %v528 = vld [vmem:[%s527] sm:$0xff]
        %v529 = vld [vmem:[#allocation2] sm:$0xff]
        %531 = vrot.lane.b32.xlu0 %v529, 96
        %v532 = vpop.permute.xlu0 %531
        %vm533 = vcmask 64512
        %v535 = vsel %vm533, %v528, 0
        %v537 = vsel %vm533, %v532, 0
        %539 = vmatprep.subr.mxu0 0.0
        %540 = vmatpush1.xpose.msra.mxu0 %v537
        %541 = vmatprep.subr.mxu0 0.0
        %542 = vmatpush1.xpose.msra.mxu0 0.0
        %543 = vmatprep.subr.mxu0 0.0
        %544 = vmatpush1.xpose.msra.mxu0 0.0
        %545 = vmatprep.subr.mxu0 0.0
        %546 = vmatpush1.xpose.msra.mxu0 0.0
        %547 = vmatprep.subr.mxu0 0.0
        %548 = vmatpush1.xpose.msra.mxu0 0.0
        %549 = vmatprep.subr.mxu0 0.0
        %550 = vmatpush1.xpose.msra.mxu0 0.0
        %551 = vmatprep.subr.mxu0 0.0
        %552 = vmatpush1.xpose.msra.mxu0 0.0
        %553 = vmatprep.subr.mxu0 0.0
        %554 = vmatpush1.xpose.msra.mxu0 0.0
        %555 = vmatprep.subr.mxu0 0.0
        %556 = vmatpush1.xpose.msra.mxu0 0.0
        %557 = vmatprep.subr.mxu0 0.0
        %558 = vmatpush1.xpose.msra.mxu0 0.0
        %559 = vmatprep.subr.mxu0 0.0
        %560 = vmatpush1.xpose.msra.mxu0 0.0
        %561 = vmatprep.subr.mxu0 0.0
        %562 = vmatpush1.xpose.msra.mxu0 0.0
        %563 = vmatprep.subr.mxu0 0.0
        %564 = vmatpush1.xpose.msra.mxu0 0.0
        %565 = vmatprep.subr.mxu0 0.0
        %566 = vmatpush1.xpose.msra.mxu0 0.0
        %567 = vmatprep.subr.mxu0 0.0
        %568 = vmatpush1.xpose.msra.mxu0 0.0
        %569 = vmatprep.subr.mxu0 0.0
        %570 = vmatpush1.xpose.msra.mxu0 0.0
        %571 = vmatprep.subr.mxu0 0.0
        %572 = vmatpush1.xpose.msra.mxu0 0.0
        %573 = vmatprep.subr.mxu0 0.0
        %574 = vmatpush1.xpose.msra.mxu0 0.0
        %575 = vmatprep.subr.mxu0 0.0
        %576 = vmatpush1.xpose.msra.mxu0 0.0
        %577 = vmatprep.subr.mxu0 0.0
        %578 = vmatpush1.xpose.msra.mxu0 0.0
        %579 = vmatprep.subr.mxu0 0.0
        %580 = vmatpush1.xpose.msra.mxu0 0.0
        %581 = vmatprep.subr.mxu0 0.0
        %582 = vmatpush1.xpose.msra.mxu0 0.0
        %583 = vmatprep.subr.mxu0 0.0
        %584 = vmatpush1.xpose.msra.mxu0 0.0
        %585 = vmatprep.subr.mxu0 0.0
        %586 = vmatpush1.xpose.msra.mxu0 0.0
        %587 = vmatprep.subr.mxu0 0.0
        %588 = vmatpush1.xpose.msra.mxu0 0.0
        %589 = vmatprep.subr.mxu0 0.0
        %590 = vmatpush1.xpose.msra.mxu0 0.0
        %591 = vmatprep.subr.mxu0 0.0
        %592 = vmatpush1.xpose.msra.mxu0 0.0
        %593 = vmatprep.subr.mxu0 0.0
        %594 = vmatpush1.xpose.msra.mxu0 0.0
        %595 = vmatprep.subr.mxu0 0.0
        %596 = vmatpush1.xpose.msra.mxu0 0.0
        %597 = vmatprep.subr.mxu0 0.0
        %598 = vmatpush1.xpose.msra.mxu0 0.0
        %599 = vmatprep.subr.mxu0 0.0
        %600 = vmatpush1.xpose.msra.mxu0 0.0
        %601 = vmatprep.subr.mxu0 0.0
        %602 = vmatpush1.xpose.msra.mxu0 0.0
        %603 = vmatprep.mubr.f32.mxu0 0.0
        %604 = vmatmul.mubr.f32.gmra.mrb[0].mxu0 %v535
        %v605 = vpop.f32.mrb[0].mxu0
        %v606 = vadd.f32 0.0, %v605
        %v607 = vpop.f32.mrb[0].mxu0
        %608 = vdwg.mxu0
        %v609 = vmul.f32 %v606, 0.35355338
        %v610 = vsel %vm533, %v609, -inf
        %611 = vmax.xlane.f32.xlu0 %v610
        %v612 = vpop.xlane.xlu0 %611
        %v613 = vsub.f32 %v609, %v612
        %v614 = vmul.f32 %v613, 1.442695
        %v615 = vpow.pop %v614
        %v616 = vsel %vm533, %v615, 0.0
        %617 = vadd.xlane.f32.xlu0 %v616
        %v618 = vpop.xlane.xlu0 %617
        %v619 = vrcp.pop %v618
        %v620 = vmul.f32 %v615, %v619
        %621 = vrot.lane.b32.xlu0 %v529, 64
        %v622 = vpop.permute.xlu0 %621
        %v625 = vsel %vm533, %v620, 0
        %627 = vmatprep.subr.mxu0 0.0
        %628 = vmatpush1.msra.mxu0 %v622
        %629 = vmatprep.subr.mxu0 0.0
        %630 = vmatpush1.msra.mxu0 0.0
        %631 = vmatprep.subr.mxu0 0.0
        %632 = vmatpush1.msra.mxu0 0.0
        %633 = vmatprep.subr.mxu0 0.0
        %634 = vmatpush1.msra.mxu0 0.0
        %635 = vmatprep.subr.mxu0 0.0
        %636 = vmatpush1.msra.mxu0 0.0
        %637 = vmatprep.subr.mxu0 0.0
        %638 = vmatpush1.msra.mxu0 0.0
        %639 = vmatprep.subr.mxu0 0.0
        %640 = vmatpush1.msra.mxu0 0.0
        %641 = vmatprep.subr.mxu0 0.0
        %642 = vmatpush1.msra.mxu0 0.0
        %643 = vmatprep.subr.mxu0 0.0
        %644 = vmatpush1.msra.mxu0 0.0
        %645 = vmatprep.subr.mxu0 0.0
        %646 = vmatpush1.msra.mxu0 0.0
        %647 = vmatprep.subr.mxu0 0.0
        %648 = vmatpush1.msra.mxu0 0.0
        %649 = vmatprep.subr.mxu0 0.0
        %650 = vmatpush1.msra.mxu0 0.0
        %651 = vmatprep.subr.mxu0 0.0
        %652 = vmatpush1.msra.mxu0 0.0
        %653 = vmatprep.subr.mxu0 0.0
        %654 = vmatpush1.msra.mxu0 0.0
        %655 = vmatprep.subr.mxu0 0.0
        %656 = vmatpush1.msra.mxu0 0.0
        %657 = vmatprep.subr.mxu0 0.0
        %658 = vmatpush1.msra.mxu0 0.0
        %659 = vmatprep.subr.mxu0 0.0
        %660 = vmatpush1.msra.mxu0 0.0
        %661 = vmatprep.subr.mxu0 0.0
        %662 = vmatpush1.msra.mxu0 0.0
        %663 = vmatprep.subr.mxu0 0.0
        %664 = vmatpush1.msra.mxu0 0.0
        %665 = vmatprep.subr.mxu0 0.0
        %666 = vmatpush1.msra.mxu0 0.0
        %667 = vmatprep.subr.mxu0 0.0
        %668 = vmatpush1.msra.mxu0 0.0
        %669 = vmatprep.subr.mxu0 0.0
        %670 = vmatpush1.msra.mxu0 0.0
        %671 = vmatprep.subr.mxu0 0.0
        %672 = vmatpush1.msra.mxu0 0.0
        %673 = vmatprep.subr.mxu0 0.0
        %674 = vmatpush1.msra.mxu0 0.0
        %675 = vmatprep.subr.mxu0 0.0
        %676 = vmatpush1.msra.mxu0 0.0
        %677 = vmatprep.subr.mxu0 0.0
        %678 = vmatpush1.msra.mxu0 0.0
        %679 = vmatprep.subr.mxu0 0.0
        %680 = vmatpush1.msra.mxu0 0.0
        %681 = vmatprep.subr.mxu0 0.0
        %682 = vmatpush1.msra.mxu0 0.0
        %683 = vmatprep.subr.mxu0 0.0
        %684 = vmatpush1.msra.mxu0 0.0
        %685 = vmatprep.subr.mxu0 0.0
        %686 = vmatpush1.msra.mxu0 0.0
        %687 = vmatprep.subr.mxu0 0.0
        %688 = vmatpush1.msra.mxu0 0.0
        %689 = vmatprep.subr.mxu0 0.0
        %690 = vmatpush1.msra.mxu0 0.0
        %691 = vmatprep.mubr.f32.mxu0 0.0
        %692 = vmatmul.mubr.f32.gmra.mrb[0].mxu0 %v625
        %v693 = vpop.f32.mrb[0].mxu0
        %v694 = vadd.f32 0.0, %v693
        %v695 = vpop.f32.mrb[0].mxu0
        %696 = vdwg.mxu0
        %v697 = vld [vmem:[#allocation9] sm:$0xff]
        %v699 = vsel %vm533, %v694, 0
        %701 = vmatprep.subr.mxu0 0.0
        %702 = vmatpush1.msra.mxu0 %v697
        %703 = vmatprep.subr.mxu0 0.0
        %704 = vmatpush1.msra.mxu0 0.0
        %705 = vmatprep.subr.mxu0 0.0
        %706 = vmatpush1.msra.mxu0 0.0
        %707 = vmatprep.subr.mxu0 0.0
        %708 = vmatpush1.msra.mxu0 0.0
        %709 = vmatprep.subr.mxu0 0.0
        %710 = vmatpush1.msra.mxu0 0.0
        %711 = vmatprep.subr.mxu0 0.0
        %712 = vmatpush1.msra.mxu0 0.0
        %713 = vmatprep.subr.mxu0 0.0
        %714 = vmatpush1.msra.mxu0 0.0
        %715 = vmatprep.subr.mxu0 0.0
        %716 = vmatpush1.msra.mxu0 0.0
        %717 = vmatprep.subr.mxu0 0.0
        %718 = vmatpush1.msra.mxu0 0.0
        %719 = vmatprep.subr.mxu0 0.0
        %720 = vmatpush1.msra.mxu0 0.0
        %721 = vmatprep.subr.mxu0 0.0
        %722 = vmatpush1.msra.mxu0 0.0
        %723 = vmatprep.subr.mxu0 0.0
        %724 = vmatpush1.msra.mxu0 0.0
        %725 = vmatprep.subr.mxu0 0.0
        %726 = vmatpush1.msra.mxu0 0.0
        %727 = vmatprep.subr.mxu0 0.0
        %728 = vmatpush1.msra.mxu0 0.0
        %729 = vmatprep.subr.mxu0 0.0
        %730 = vmatpush1.msra.mxu0 0.0
        %731 = vmatprep.subr.mxu0 0.0
        %732 = vmatpush1.msra.mxu0 0.0
        %733 = vmatprep.subr.mxu0 0.0
        %734 = vmatpush1.msra.mxu0 0.0
        %735 = vmatprep.subr.mxu0 0.0
        %736 = vmatpush1.msra.mxu0 0.0
        %737 = vmatprep.subr.mxu0 0.0
        %738 = vmatpush1.msra.mxu0 0.0
        %739 = vmatprep.subr.mxu0 0.0
        %740 = vmatpush1.msra.mxu0 0.0
        %741 = vmatprep.subr.mxu0 0.0
        %742 = vmatpush1.msra.mxu0 0.0
        %743 = vmatprep.subr.mxu0 0.0
        %744 = vmatpush1.msra.mxu0 0.0
        %745 = vmatprep.subr.mxu0 0.0
        %746 = vmatpush1.msra.mxu0 0.0
        %747 = vmatprep.subr.mxu0 0.0
        %748 = vmatpush1.msra.mxu0 0.0
        %749 = vmatprep.subr.mxu0 0.0
        %750 = vmatpush1.msra.mxu0 0.0
        %751 = vmatprep.subr.mxu0 0.0
        %752 = vmatpush1.msra.mxu0 0.0
        %753 = vmatprep.subr.mxu0 0.0
        %754 = vmatpush1.msra.mxu0 0.0
        %755 = vmatprep.subr.mxu0 0.0
        %756 = vmatpush1.msra.mxu0 0.0
        %757 = vmatprep.subr.mxu0 0.0
        %758 = vmatpush1.msra.mxu0 0.0
        %759 = vmatprep.subr.mxu0 0.0
        %760 = vmatpush1.msra.mxu0 0.0
        %761 = vmatprep.subr.mxu0 0.0
        %762 = vmatpush1.msra.mxu0 0.0
        %763 = vmatprep.subr.mxu0 0.0
        %764 = vmatpush1.msra.mxu0 0.0
        %765 = vmatprep.mubr.f32.mxu0 0.0
        %766 = vmatmul.mubr.f32.gmra.mrb[0].mxu0 %v699
        %v767 = vpop.f32.mrb[0].mxu0
        %v768 = vadd.f32 0.0, %v767
        %v769 = vpop.f32.mrb[0].mxu0
        %770 = vdwg.mxu0
        %v771 = vadd.f32 %v525, %v768
        %772 = vrot.lane.b32.xlu0 %v528, 120
        %v773 = vpop.permute.xlu0 %772
        %774 = vrot.lane.b32.xlu0 %v529, 88
        %v775 = vpop.permute.xlu0 %774
        %v776 = vsel %vm533, %v773, 0
        %v778 = vsel %vm533, %v775, 0
        %780 = vmatprep.subr.mxu0 0.0
        %781 = vmatpush1.xpose.msra.mxu0 %v778
        %782 = vmatprep.subr.mxu0 0.0
        %783 = vmatpush1.xpose.msra.mxu0 0.0
        %784 = vmatprep.subr.mxu0 0.0
        %785 = vmatpush1.xpose.msra.mxu0 0.0
        %786 = vmatprep.subr.mxu0 0.0
        %787 = vmatpush1.xpose.msra.mxu0 0.0
        %788 = vmatprep.subr.mxu0 0.0
        %789 = vmatpush1.xpose.msra.mxu0 0.0
        %790 = vmatprep.subr.mxu0 0.0
        %791 = vmatpush1.xpose.msra.mxu0 0.0
        %792 = vmatprep.subr.mxu0 0.0
        %793 = vmatpush1.xpose.msra.mxu0 0.0
        %794 = vmatprep.subr.mxu0 0.0
        %795 = vmatpush1.xpose.msra.mxu0 0.0
        %796 = vmatprep.subr.mxu0 0.0
        %797 = vmatpush1.xpose.msra.mxu0 0.0
        %798 = vmatprep.subr.mxu0 0.0
        %799 = vmatpush1.xpose.msra.mxu0 0.0
        %800 = vmatprep.subr.mxu0 0.0
        %801 = vmatpush1.xpose.msra.mxu0 0.0
        %802 = vmatprep.subr.mxu0 0.0
        %803 = vmatpush1.xpose.msra.mxu0 0.0
        %804 = vmatprep.subr.mxu0 0.0
        %805 = vmatpush1.xpose.msra.mxu0 0.0
        %806 = vmatprep.subr.mxu0 0.0
        %807 = vmatpush1.xpose.msra.mxu0 0.0
        %808 = vmatprep.subr.mxu0 0.0
        %809 = vmatpush1.xpose.msra.mxu0 0.0
        %810 = vmatprep.subr.mxu0 0.0
        %811 = vmatpush1.xpose.msra.mxu0 0.0
        %812 = vmatprep.subr.mxu0 0.0
        %813 = vmatpush1.xpose.msra.mxu0 0.0
        %814 = vmatprep.subr.mxu0 0.0
        %815 = vmatpush1.xpose.msra.mxu0 0.0
        %816 = vmatprep.subr.mxu0 0.0
        %817 = vmatpush1.xpose.msra.mxu0 0.0
        %818 = vmatprep.subr.mxu0 0.0
        %819 = vmatpush1.xpose.msra.mxu0 0.0
        %820 = vmatprep.subr.mxu0 0.0
        %821 = vmatpush1.xpose.msra.mxu0 0.0
        %822 = vmatprep.subr.mxu0 0.0
        %823 = vmatpush1.xpose.msra.mxu0 0.0
        %824 = vmatprep.subr.mxu0 0.0
        %825 = vmatpush1.xpose.msra.mxu0 0.0
        %826 = vmatprep.subr.mxu0 0.0
        %827 = vmatpush1.xpose.msra.mxu0 0.0
        %828 = vmatprep.subr.mxu0 0.0
        %829 = vmatpush1.xpose.msra.mxu0 0.0
        %830 = vmatprep.subr.mxu0 0.0
        %831 = vmatpush1.xpose.msra.mxu0 0.0
        %832 = vmatprep.subr.mxu0 0.0
        %833 = vmatpush1.xpose.msra.mxu0 0.0
        %834 = vmatprep.subr.mxu0 0.0
        %835 = vmatpush1.xpose.msra.mxu0 0.0
        %836 = vmatprep.subr.mxu0 0.0
        %837 = vmatpush1.xpose.msra.mxu0 0.0
        %838 = vmatprep.subr.mxu0 0.0
        %839 = vmatpush1.xpose.msra.mxu0 0.0
        %840 = vmatprep.subr.mxu0 0.0
        %841 = vmatpush1.xpose.msra.mxu0 0.0
        %842 = vmatprep.subr.mxu0 0.0
        %843 = vmatpush1.xpose.msra.mxu0 0.0
        %844 = vmatprep.mubr.f32.mxu0 0.0
        %845 = vmatmul.mubr.f32.gmra.mrb[0].mxu0 %v776
        %v846 = vpop.f32.mrb[0].mxu0
        %v847 = vadd.f32 0.0, %v846
        %v848 = vpop.f32.mrb[0].mxu0
        %849 = vdwg.mxu0
        %v850 = vmul.f32 %v847, 0.35355338
        %v851 = vsel %vm533, %v850, -inf
        %852 = vmax.xlane.f32.xlu0 %v851
        %v853 = vpop.xlane.xlu0 %852
        %v854 = vsub.f32 %v850, %v853
        %v855 = vmul.f32 %v854, 1.442695
        %v856 = vpow.pop %v855
        %v857 = vsel %vm533, %v856, 0.0
        %858 = vadd.xlane.f32.xlu0 %v857
        %v859 = vpop.xlane.xlu0 %858
        %v860 = vrcp.pop %v859
        %v861 = vmul.f32 %v856, %v860
        %862 = vrot.lane.b32.xlu0 %v529, 56
        %v863 = vpop.permute.xlu0 %862
        %v866 = vsel %vm533, %v861, 0
        %868 = vmatprep.subr.mxu0 0.0
        %869 = vmatpush1.msra.mxu0 %v863
        %870 = vmatprep.subr.mxu0 0.0
        %871 = vmatpush1.msra.mxu0 0.0
        %872 = vmatprep.subr.mxu0 0.0
        %873 = vmatpush1.msra.mxu0 0.0
        %874 = vmatprep.subr.mxu0 0.0
        %875 = vmatpush1.msra.mxu0 0.0
        %876 = vmatprep.subr.mxu0 0.0
        %877 = vmatpush1.msra.mxu0 0.0
        %878 = vmatprep.subr.mxu0 0.0
        %879 = vmatpush1.msra.mxu0 0.0
        %880 = vmatprep.subr.mxu0 0.0
        %881 = vmatpush1.msra.mxu0 0.0
        %882 = vmatprep.subr.mxu0 0.0
        %883 = vmatpush1.msra.mxu0 0.0
        %884 = vmatprep.subr.mxu0 0.0
        %885 = vmatpush1.msra.mxu0 0.0
        %886 = vmatprep.subr.mxu0 0.0
        %887 = vmatpush1.msra.mxu0 0.0
        %888 = vmatprep.subr.mxu0 0.0
        %889 = vmatpush1.msra.mxu0 0.0
        %890 = vmatprep.subr.mxu0 0.0
        %891 = vmatpush1.msra.mxu0 0.0
        %892 = vmatprep.subr.mxu0 0.0
        %893 = vmatpush1.msra.mxu0 0.0
        %894 = vmatprep.subr.mxu0 0.0
        %895 = vmatpush1.msra.mxu0 0.0
        %896 = vmatprep.subr.mxu0 0.0
        %897 = vmatpush1.msra.mxu0 0.0
        %898 = vmatprep.subr.mxu0 0.0
        %899 = vmatpush1.msra.mxu0 0.0
        %900 = vmatprep.subr.mxu0 0.0
        %901 = vmatpush1.msra.mxu0 0.0
        %902 = vmatprep.subr.mxu0 0.0
        %903 = vmatpush1.msra.mxu0 0.0
        %904 = vmatprep.subr.mxu0 0.0
        %905 = vmatpush1.msra.mxu0 0.0
        %906 = vmatprep.subr.mxu0 0.0
        %907 = vmatpush1.msra.mxu0 0.0
        %908 = vmatprep.subr.mxu0 0.0
        %909 = vmatpush1.msra.mxu0 0.0
        %910 = vmatprep.subr.mxu0 0.0
        %911 = vmatpush1.msra.mxu0 0.0
        %912 = vmatprep.subr.mxu0 0.0
        %913 = vmatpush1.msra.mxu0 0.0
        %914 = vmatprep.subr.mxu0 0.0
        %915 = vmatpush1.msra.mxu0 0.0
        %916 = vmatprep.subr.mxu0 0.0
        %917 = vmatpush1.msra.mxu0 0.0
        %918 = vmatprep.subr.mxu0 0.0
        %919 = vmatpush1.msra.mxu0 0.0
        %920 = vmatprep.subr.mxu0 0.0
        %921 = vmatpush1.msra.mxu0 0.0
        %922 = vmatprep.subr.mxu0 0.0
        %923 = vmatpush1.msra.mxu0 0.0
        %924 = vmatprep.subr.mxu0 0.0
        %925 = vmatpush1.msra.mxu0 0.0
        %926 = vmatprep.subr.mxu0 0.0
        %927 = vmatpush1.msra.mxu0 0.0
        %928 = vmatprep.subr.mxu0 0.0
        %929 = vmatpush1.msra.mxu0 0.0
        %930 = vmatprep.subr.mxu0 0.0
        %931 = vmatpush1.msra.mxu0 0.0
        %932 = vmatprep.mubr.f32.mxu0 0.0
        %933 = vmatmul.mubr.f32.gmra.mrb[0].mxu0 %v866
        %v934 = vpop.f32.mrb[0].mxu0
        %v935 = vadd.f32 0.0, %v934
        %v936 = vpop.f32.mrb[0].mxu0
        %937 = vdwg.mxu0
        %v938 = vld [vmem:[#allocation9 + $0x8] sm:$0xff]
        %v940 = vsel %vm533, %v935, 0
        %942 = vmatprep.subr.mxu0 0.0
        %943 = vmatpush1.msra.mxu0 %v938
        %944 = vmatprep.subr.mxu0 0.0
        %945 = vmatpush1.msra.mxu0 0.0
        %946 = vmatprep.subr.mxu0 0.0
        %947 = vmatpush1.msra.mxu0 0.0
        %948 = vmatprep.subr.mxu0 0.0
        %949 = vmatpush1.msra.mxu0 0.0
        %950 = vmatprep.subr.mxu0 0.0
        %951 = vmatpush1.msra.mxu0 0.0
        %952 = vmatprep.subr.mxu0 0.0
        %953 = vmatpush1.msra.mxu0 0.0
        %954 = vmatprep.subr.mxu0 0.0
        %955 = vmatpush1.msra.mxu0 0.0
        %956 = vmatprep.subr.mxu0 0.0
        %957 = vmatpush1.msra.mxu0 0.0
        %958 = vmatprep.subr.mxu0 0.0
        %959 = vmatpush1.msra.mxu0 0.0
        %960 = vmatprep.subr.mxu0 0.0
        %961 = vmatpush1.msra.mxu0 0.0
        %962 = vmatprep.subr.mxu0 0.0
        %963 = vmatpush1.msra.mxu0 0.0
        %964 = vmatprep.subr.mxu0 0.0
        %965 = vmatpush1.msra.mxu0 0.0
        %966 = vmatprep.subr.mxu0 0.0
        %967 = vmatpush1.msra.mxu0 0.0
        %968 = vmatprep.subr.mxu0 0.0
        %969 = vmatpush1.msra.mxu0 0.0
        %970 = vmatprep.subr.mxu0 0.0
        %971 = vmatpush1.msra.mxu0 0.0
        %972 = vmatprep.subr.mxu0 0.0
        %973 = vmatpush1.msra.mxu0 0.0
        %974 = vmatprep.subr.mxu0 0.0
        %975 = vmatpush1.msra.mxu0 0.0
        %976 = vmatprep.subr.mxu0 0.0
        %977 = vmatpush1.msra.mxu0 0.0
        %978 = vmatprep.subr.mxu0 0.0
        %979 = vmatpush1.msra.mxu0 0.0
        %980 = vmatprep.subr.mxu0 0.0
        %981 = vmatpush1.msra.mxu0 0.0
        %982 = vmatprep.subr.mxu0 0.0
        %983 = vmatpush1.msra.mxu0 0.0
        %984 = vmatprep.subr.mxu0 0.0
        %985 = vmatpush1.msra.mxu0 0.0
        %986 = vmatprep.subr.mxu0 0.0
        %987 = vmatpush1.msra.mxu0 0.0
        %988 = vmatprep.subr.mxu0 0.0
        %989 = vmatpush1.msra.mxu0 0.0
        %990 = vmatprep.subr.mxu0 0.0
        %991 = vmatpush1.msra.mxu0 0.0
        %992 = vmatprep.subr.mxu0 0.0
        %993 = vmatpush1.msra.mxu0 0.0
        %994 = vmatprep.subr.mxu0 0.0
        %995 = vmatpush1.msra.mxu0 0.0
        %996 = vmatprep.subr.mxu0 0.0
        %997 = vmatpush1.msra.mxu0 0.0
        %998 = vmatprep.subr.mxu0 0.0
        %999 = vmatpush1.msra.mxu0 0.0
        %1000 = vmatprep.subr.mxu0 0.0
        %1001 = vmatpush1.msra.mxu0 0.0
        %1002 = vmatprep.subr.mxu0 0.0
        %1003 = vmatpush1.msra.mxu0 0.0
        %1004 = vmatprep.subr.mxu0 0.0
        %1005 = vmatpush1.msra.mxu0 0.0
        %1006 = vmatprep.mubr.f32.mxu0 0.0
        %1007 = vmatmul.mubr.f32.gmra.mrb[0].mxu0 %v940
        %v1008 = vpop.f32.mrb[0].mxu0
        %v1009 = vadd.f32 0.0, %v1008
        %v1010 = vpop.f32.mrb[0].mxu0
        %1011 = vdwg.mxu0
        %v1012 = vadd.f32 %v771, %v1009
        %1013 = vrot.lane.b32.xlu0 %v528, 112
        %v1014 = vpop.permute.xlu0 %1013
        %1015 = vrot.lane.b32.xlu0 %v529, 80
        %v1016 = vpop.permute.xlu0 %1015
        %v1017 = vsel %vm533, %v1014, 0
        %v1019 = vsel %vm533, %v1016, 0
        %1021 = vmatprep.subr.mxu0 0.0
        %1022 = vmatpush1.xpose.msra.mxu0 %v1019
        %1023 = vmatprep.subr.mxu0 0.0
        %1024 = vmatpush1.xpose.msra.mxu0 0.0
        %1025 = vmatprep.subr.mxu0 0.0
        %1026 = vmatpush1.xpose.msra.mxu0 0.0
        %1027 = vmatprep.subr.mxu0 0.0
        %1028 = vmatpush1.xpose.msra.mxu0 0.0
        %1029 = vmatprep.subr.mxu0 0.0
        %1030 = vmatpush1.xpose.msra.mxu0 0.0
        %1031 = vmatprep.subr.mxu0 0.0
        %1032 = vmatpush1.xpose.msra.mxu0 0.0
        %1033 = vmatprep.subr.mxu0 0.0
        %1034 = vmatpush1.xpose.msra.mxu0 0.0
        %1035 = vmatprep.subr.mxu0 0.0
        %1036 = vmatpush1.xpose.msra.mxu0 0.0
        %1037 = vmatprep.subr.mxu0 0.0
        %1038 = vmatpush1.xpose.msra.mxu0 0.0
        %1039 = vmatprep.subr.mxu0 0.0
        %1040 = vmatpush1.xpose.msra.mxu0 0.0
        %1041 = vmatprep.subr.mxu0 0.0
        %1042 = vmatpush1.xpose.msra.mxu0 0.0
        %1043 = vmatprep.subr.mxu0 0.0
        %1044 = vmatpush1.xpose.msra.mxu0 0.0
        %1045 = vmatprep.subr.mxu0 0.0
        %1046 = vmatpush1.xpose.msra.mxu0 0.0
        %1047 = vmatprep.subr.mxu0 0.0
        %1048 = vmatpush1.xpose.msra.mxu0 0.0
        %1049 = vmatprep.subr.mxu0 0.0
        %1050 = vmatpush1.xpose.msra.mxu0 0.0
        %1051 = vmatprep.subr.mxu0 0.0
        %1052 = vmatpush1.xpose.msra.mxu0 0.0
        %1053 = vmatprep.subr.mxu0 0.0
        %1054 = vmatpush1.xpose.msra.mxu0 0.0
        %1055 = vmatprep.subr.mxu0 0.0
        %1056 = vmatpush1.xpose.msra.mxu0 0.0
        %1057 = vmatprep.subr.mxu0 0.0
        %1058 = vmatpush1.xpose.msra.mxu0 0.0
        %1059 = vmatprep.subr.mxu0 0.0
        %1060 = vmatpush1.xpose.msra.mxu0 0.0
        %1061 = vmatprep.subr.mxu0 0.0
        %1062 = vmatpush1.xpose.msra.mxu0 0.0
        %1063 = vmatprep.subr.mxu0 0.0
        %1064 = vmatpush1.xpose.msra.mxu0 0.0
        %1065 = vmatprep.subr.mxu0 0.0
        %1066 = vmatpush1.xpose.msra.mxu0 0.0
        %1067 = vmatprep.subr.mxu0 0.0
        %1068 = vmatpush1.xpose.msra.mxu0 0.0
        %1069 = vmatprep.subr.mxu0 0.0
        %1070 = vmatpush1.xpose.msra.mxu0 0.0
        %1071 = vmatprep.subr.mxu0 0.0
        %1072 = vmatpush1.xpose.msra.mxu0 0.0
        %1073 = vmatprep.subr.mxu0 0.0
        %1074 = vmatpush1.xpose.msra.mxu0 0.0
        %1075 = vmatprep.subr.mxu0 0.0
        %1076 = vmatpush1.xpose.msra.mxu0 0.0
        %1077 = vmatprep.subr.mxu0 0.0
        %1078 = vmatpush1.xpose.msra.mxu0 0.0
        %1079 = vmatprep.subr.mxu0 0.0
        %1080 = vmatpush1.xpose.msra.mxu0 0.0
        %1081 = vmatprep.subr.mxu0 0.0
        %1082 = vmatpush1.xpose.msra.mxu0 0.0
        %1083 = vmatprep.subr.mxu0 0.0
        %1084 = vmatpush1.xpose.msra.mxu0 0.0
        %1085 = vmatprep.mubr.f32.mxu0 0.0
        %1086 = vmatmul.mubr.f32.gmra.mrb[0].mxu0 %v1017
        %v1087 = vpop.f32.mrb[0].mxu0
        %v1088 = vadd.f32 0.0, %v1087
        %v1089 = vpop.f32.mrb[0].mxu0
        %1090 = vdwg.mxu0
        %v1091 = vmul.f32 %v1088, 0.35355338
        %v1092 = vsel %vm533, %v1091, -inf
        %1093 = vmax.xlane.f32.xlu0 %v1092
        %v1094 = vpop.xlane.xlu0 %1093
        %v1095 = vsub.f32 %v1091, %v1094
        %v1096 = vmul.f32 %v1095, 1.442695
        %v1097 = vpow.pop %v1096
        %v1098 = vsel %vm533, %v1097, 0.0
        %1099 = vadd.xlane.f32.xlu0 %v1098
        %v1100 = vpop.xlane.xlu0 %1099
        %v1101 = vrcp.pop %v1100
        %v1102 = vmul.f32 %v1097, %v1101
        %1103 = vrot.lane.b32.xlu0 %v529, 48
        %v1104 = vpop.permute.xlu0 %1103
        %v1107 = vsel %vm533, %v1102, 0
        %1109 = vmatprep.subr.mxu0 0.0
        %1110 = vmatpush1.msra.mxu0 %v1104
        %1111 = vmatprep.subr.mxu0 0.0
        %1112 = vmatpush1.msra.mxu0 0.0
        %1113 = vmatprep.subr.mxu0 0.0
        %1114 = vmatpush1.msra.mxu0 0.0
        %1115 = vmatprep.subr.mxu0 0.0
        %1116 = vmatpush1.msra.mxu0 0.0
        %1117 = vmatprep.subr.mxu0 0.0
        %1118 = vmatpush1.msra.mxu0 0.0
        %1119 = vmatprep.subr.mxu0 0.0
        %1120 = vmatpush1.msra.mxu0 0.0
        %1121 = vmatprep.subr.mxu0 0.0
        %1122 = vmatpush1.msra.mxu0 0.0
        %1123 = vmatprep.subr.mxu0 0.0
        %1124 = vmatpush1.msra.mxu0 0.0
        %1125 = vmatprep.subr.mxu0 0.0
        %1126 = vmatpush1.msra.mxu0 0.0
        %1127 = vmatprep.subr.mxu0 0.0
        %1128 = vmatpush1.msra.mxu0 0.0
        %1129 = vmatprep.subr.mxu0 0.0
        %1130 = vmatpush1.msra.mxu0 0.0
        %1131 = vmatprep.subr.mxu0 0.0
        %1132 = vmatpush1.msra.mxu0 0.0
        %1133 = vmatprep.subr.mxu0 0.0
        %1134 = vmatpush1.msra.mxu0 0.0
        %1135 = vmatprep.subr.mxu0 0.0
        %1136 = vmatpush1.msra.mxu0 0.0
        %1137 = vmatprep.subr.mxu0 0.0
        %1138 = vmatpush1.msra.mxu0 0.0
        %1139 = vmatprep.subr.mxu0 0.0
        %1140 = vmatpush1.msra.mxu0 0.0
        %1141 = vmatprep.subr.mxu0 0.0
        %1142 = vmatpush1.msra.mxu0 0.0
        %1143 = vmatprep.subr.mxu0 0.0
        %1144 = vmatpush1.msra.mxu0 0.0
        %1145 = vmatprep.subr.mxu0 0.0
        %1146 = vmatpush1.msra.mxu0 0.0
        %1147 = vmatprep.subr.mxu0 0.0
        %1148 = vmatpush1.msra.mxu0 0.0
        %1149 = vmatprep.subr.mxu0 0.0
        %1150 = vmatpush1.msra.mxu0 0.0
        %1151 = vmatprep.subr.mxu0 0.0
        %1152 = vmatpush1.msra.mxu0 0.0
        %1153 = vmatprep.subr.mxu0 0.0
        %1154 = vmatpush1.msra.mxu0 0.0
        %1155 = vmatprep.subr.mxu0 0.0
        %1156 = vmatpush1.msra.mxu0 0.0
        %1157 = vmatprep.subr.mxu0 0.0
        %1158 = vmatpush1.msra.mxu0 0.0
        %1159 = vmatprep.subr.mxu0 0.0
        %1160 = vmatpush1.msra.mxu0 0.0
        %1161 = vmatprep.subr.mxu0 0.0
        %1162 = vmatpush1.msra.mxu0 0.0
        %1163 = vmatprep.subr.mxu0 0.0
        %1164 = vmatpush1.msra.mxu0 0.0
        %1165 = vmatprep.subr.mxu0 0.0
        %1166 = vmatpush1.msra.mxu0 0.0
        %1167 = vmatprep.subr.mxu0 0.0
        %1168 = vmatpush1.msra.mxu0 0.0
        %1169 = vmatprep.subr.mxu0 0.0
        %1170 = vmatpush1.msra.mxu0 0.0
        %1171 = vmatprep.subr.mxu0 0.0
        %1172 = vmatpush1.msra.mxu0 0.0
        %1173 = vmatprep.mubr.f32.mxu0 0.0
        %1174 = vmatmul.mubr.f32.gmra.mrb[0].mxu0 %v1107
        %v1175 = vpop.f32.mrb[0].mxu0
        %v1176 = vadd.f32 0.0, %v1175
        %v1177 = vpop.f32.mrb[0].mxu0
        %1178 = vdwg.mxu0
        %v1179 = vld [vmem:[#allocation9 + $0x10] sm:$0xff]
        %v1181 = vsel %vm533, %v1176, 0
        %1183 = vmatprep.subr.mxu0 0.0
        %1184 = vmatpush1.msra.mxu0 %v1179
        %1185 = vmatprep.subr.mxu0 0.0
        %1186 = vmatpush1.msra.mxu0 0.0
        %1187 = vmatprep.subr.mxu0 0.0
        %1188 = vmatpush1.msra.mxu0 0.0
        %1189 = vmatprep.subr.mxu0 0.0
        %1190 = vmatpush1.msra.mxu0 0.0
        %1191 = vmatprep.subr.mxu0 0.0
        %1192 = vmatpush1.msra.mxu0 0.0
        %1193 = vmatprep.subr.mxu0 0.0
        %1194 = vmatpush1.msra.mxu0 0.0
        %1195 = vmatprep.subr.mxu0 0.0
        %1196 = vmatpush1.msra.mxu0 0.0
        %1197 = vmatprep.subr.mxu0 0.0
        %1198 = vmatpush1.msra.mxu0 0.0
        %1199 = vmatprep.subr.mxu0 0.0
        %1200 = vmatpush1.msra.mxu0 0.0
        %1201 = vmatprep.subr.mxu0 0.0
        %1202 = vmatpush1.msra.mxu0 0.0
        %1203 = vmatprep.subr.mxu0 0.0
        %1204 = vmatpush1.msra.mxu0 0.0
        %1205 = vmatprep.subr.mxu0 0.0
        %1206 = vmatpush1.msra.mxu0 0.0
        %1207 = vmatprep.subr.mxu0 0.0
        %1208 = vmatpush1.msra.mxu0 0.0
        %1209 = vmatprep.subr.mxu0 0.0
        %1210 = vmatpush1.msra.mxu0 0.0
        %1211 = vmatprep.subr.mxu0 0.0
        %1212 = vmatpush1.msra.mxu0 0.0
        %1213 = vmatprep.subr.mxu0 0.0
        %1214 = vmatpush1.msra.mxu0 0.0
        %1215 = vmatprep.subr.mxu0 0.0
        %1216 = vmatpush1.msra.mxu0 0.0
        %1217 = vmatprep.subr.mxu0 0.0
        %1218 = vmatpush1.msra.mxu0 0.0
        %1219 = vmatprep.subr.mxu0 0.0
        %1220 = vmatpush1.msra.mxu0 0.0
        %1221 = vmatprep.subr.mxu0 0.0
        %1222 = vmatpush1.msra.mxu0 0.0
        %1223 = vmatprep.subr.mxu0 0.0
        %1224 = vmatpush1.msra.mxu0 0.0
        %1225 = vmatprep.subr.mxu0 0.0
        %1226 = vmatpush1.msra.mxu0 0.0
        %1227 = vmatprep.subr.mxu0 0.0
        %1228 = vmatpush1.msra.mxu0 0.0
        %1229 = vmatprep.subr.mxu0 0.0
        %1230 = vmatpush1.msra.mxu0 0.0
        %1231 = vmatprep.subr.mxu0 0.0
        %1232 = vmatpush1.msra.mxu0 0.0
        %1233 = vmatprep.subr.mxu0 0.0
        %1234 = vmatpush1.msra.mxu0 0.0
        %1235 = vmatprep.subr.mxu0 0.0
        %1236 = vmatpush1.msra.mxu0 0.0
        %1237 = vmatprep.subr.mxu0 0.0
        %1238 = vmatpush1.msra.mxu0 0.0
        %1239 = vmatprep.subr.mxu0 0.0
        %1240 = vmatpush1.msra.mxu0 0.0
        %1241 = vmatprep.subr.mxu0 0.0
        %1242 = vmatpush1.msra.mxu0 0.0
        %1243 = vmatprep.subr.mxu0 0.0
        %1244 = vmatpush1.msra.mxu0 0.0
        %1245 = vmatprep.subr.mxu0 0.0
        %1246 = vmatpush1.msra.mxu0 0.0
        %1247 = vmatprep.mubr.f32.mxu0 0.0
        %1248 = vmatmul.mubr.f32.gmra.mrb[0].mxu0 %v1181
        %v1249 = vpop.f32.mrb[0].mxu0
        %v1250 = vadd.f32 0.0, %v1249
        %v1251 = vpop.f32.mrb[0].mxu0
        %1252 = vdwg.mxu0
        %v1253 = vadd.f32 %v1012, %v1250
        %1254 = vrot.lane.b32.xlu0 %v528, 104
        %v1255 = vpop.permute.xlu0 %1254
        %1256 = vrot.lane.b32.xlu0 %v529, 72
        %v1257 = vpop.permute.xlu0 %1256
        %v1258 = vsel %vm533, %v1255, 0
        %v1260 = vsel %vm533, %v1257, 0
        %1262 = vmatprep.subr.mxu0 0.0
        %1263 = vmatpush1.xpose.msra.mxu0 %v1260
        %1264 = vmatprep.subr.mxu0 0.0
        %1265 = vmatpush1.xpose.msra.mxu0 0.0
        %1266 = vmatprep.subr.mxu0 0.0
        %1267 = vmatpush1.xpose.msra.mxu0 0.0
        %1268 = vmatprep.subr.mxu0 0.0
        %1269 = vmatpush1.xpose.msra.mxu0 0.0
        %1270 = vmatprep.subr.mxu0 0.0
        %1271 = vmatpush1.xpose.msra.mxu0 0.0
        %1272 = vmatprep.subr.mxu0 0.0
        %1273 = vmatpush1.xpose.msra.mxu0 0.0
        %1274 = vmatprep.subr.mxu0 0.0
        %1275 = vmatpush1.xpose.msra.mxu0 0.0
        %1276 = vmatprep.subr.mxu0 0.0
        %1277 = vmatpush1.xpose.msra.mxu0 0.0
        %1278 = vmatprep.subr.mxu0 0.0
        %1279 = vmatpush1.xpose.msra.mxu0 0.0
        %1280 = vmatprep.subr.mxu0 0.0
        %1281 = vmatpush1.xpose.msra.mxu0 0.0
        %1282 = vmatprep.subr.mxu0 0.0
        %1283 = vmatpush1.xpose.msra.mxu0 0.0
        %1284 = vmatprep.subr.mxu0 0.0
        %1285 = vmatpush1.xpose.msra.mxu0 0.0
        %1286 = vmatprep.subr.mxu0 0.0
        %1287 = vmatpush1.xpose.msra.mxu0 0.0
        %1288 = vmatprep.subr.mxu0 0.0
        %1289 = vmatpush1.xpose.msra.mxu0 0.0
        %1290 = vmatprep.subr.mxu0 0.0
        %1291 = vmatpush1.xpose.msra.mxu0 0.0
        %1292 = vmatprep.subr.mxu0 0.0
        %1293 = vmatpush1.xpose.msra.mxu0 0.0
        %1294 = vmatprep.subr.mxu0 0.0
        %1295 = vmatpush1.xpose.msra.mxu0 0.0
        %1296 = vmatprep.subr.mxu0 0.0
        %1297 = vmatpush1.xpose.msra.mxu0 0.0
        %1298 = vmatprep.subr.mxu0 0.0
        %1299 = vmatpush1.xpose.msra.mxu0 0.0
        %1300 = vmatprep.subr.mxu0 0.0
        %1301 = vmatpush1.xpose.msra.mxu0 0.0
        %1302 = vmatprep.subr.mxu0 0.0
        %1303 = vmatpush1.xpose.msra.mxu0 0.0
        %1304 = vmatprep.subr.mxu0 0.0
        %1305 = vmatpush1.xpose.msra.mxu0 0.0
        %1306 = vmatprep.subr.mxu0 0.0
        %1307 = vmatpush1.xpose.msra.mxu0 0.0
        %1308 = vmatprep.subr.mxu0 0.0
        %1309 = vmatpush1.xpose.msra.mxu0 0.0
        %1310 = vmatprep.subr.mxu0 0.0
        %1311 = vmatpush1.xpose.msra.mxu0 0.0
        %1312 = vmatprep.subr.mxu0 0.0
        %1313 = vmatpush1.xpose.msra.mxu0 0.0
        %1314 = vmatprep.subr.mxu0 0.0
        %1315 = vmatpush1.xpose.msra.mxu0 0.0
        %1316 = vmatprep.subr.mxu0 0.0
        %1317 = vmatpush1.xpose.msra.mxu0 0.0
        %1318 = vmatprep.subr.mxu0 0.0
        %1319 = vmatpush1.xpose.msra.mxu0 0.0
        %1320 = vmatprep.subr.mxu0 0.0
        %1321 = vmatpush1.xpose.msra.mxu0 0.0
        %1322 = vmatprep.subr.mxu0 0.0
        %1323 = vmatpush1.xpose.msra.mxu0 0.0
        %1324 = vmatprep.subr.mxu0 0.0
        %1325 = vmatpush1.xpose.msra.mxu0 0.0
        %1326 = vmatprep.mubr.f32.mxu0 0.0
        %1327 = vmatmul.mubr.f32.gmra.mrb[0].mxu0 %v1258
        %v1328 = vpop.f32.mrb[0].mxu0
        %v1329 = vadd.f32 0.0, %v1328
        %v1330 = vpop.f32.mrb[0].mxu0
        %1331 = vdwg.mxu0
        %v1332 = vmul.f32 %v1329, 0.35355338
        %v1333 = vsel %vm533, %v1332, -inf
        %1334 = vmax.xlane.f32.xlu0 %v1333
        %v1335 = vpop.xlane.xlu0 %1334
        %v1336 = vsub.f32 %v1332, %v1335
        %v1337 = vmul.f32 %v1336, 1.442695
        %v1338 = vpow.pop %v1337
        %v1339 = vsel %vm533, %v1338, 0.0
        %1340 = vadd.xlane.f32.xlu0 %v1339
        %v1341 = vpop.xlane.xlu0 %1340
        %v1342 = vrcp.pop %v1341
        %v1343 = vmul.f32 %v1338, %v1342
        %1344 = vrot.lane.b32.xlu0 %v529, 40
        %v1345 = vpop.permute.xlu0 %1344
        %v1348 = vsel %vm533, %v1343, 0
        %1350 = vmatprep.subr.mxu0 0.0
        %1351 = vmatpush1.msra.mxu0 %v1345
        %1352 = vmatprep.subr.mxu0 0.0
        %1353 = vmatpush1.msra.mxu0 0.0
        %1354 = vmatprep.subr.mxu0 0.0
        %1355 = vmatpush1.msra.mxu0 0.0
        %1356 = vmatprep.subr.mxu0 0.0
        %1357 = vmatpush1.msra.mxu0 0.0
        %1358 = vmatprep.subr.mxu0 0.0
        %1359 = vmatpush1.msra.mxu0 0.0
        %1360 = vmatprep.subr.mxu0 0.0
        %1361 = vmatpush1.msra.mxu0 0.0
        %1362 = vmatprep.subr.mxu0 0.0
        %1363 = vmatpush1.msra.mxu0 0.0
        %1364 = vmatprep.subr.mxu0 0.0
        %1365 = vmatpush1.msra.mxu0 0.0
        %1366 = vmatprep.subr.mxu0 0.0
        %1367 = vmatpush1.msra.mxu0 0.0
        %1368 = vmatprep.subr.mxu0 0.0
        %1369 = vmatpush1.msra.mxu0 0.0
        %1370 = vmatprep.subr.mxu0 0.0
        %1371 = vmatpush1.msra.mxu0 0.0
        %1372 = vmatprep.subr.mxu0 0.0
        %1373 = vmatpush1.msra.mxu0 0.0
        %1374 = vmatprep.subr.mxu0 0.0
        %1375 = vmatpush1.msra.mxu0 0.0
        %1376 = vmatprep.subr.mxu0 0.0
        %1377 = vmatpush1.msra.mxu0 0.0
        %1378 = vmatprep.subr.mxu0 0.0
        %1379 = vmatpush1.msra.mxu0 0.0
        %1380 = vmatprep.subr.mxu0 0.0
        %1381 = vmatpush1.msra.mxu0 0.0
        %1382 = vmatprep.subr.mxu0 0.0
        %1383 = vmatpush1.msra.mxu0 0.0
        %1384 = vmatprep.subr.mxu0 0.0
        %1385 = vmatpush1.msra.mxu0 0.0
        %1386 = vmatprep.subr.mxu0 0.0
        %1387 = vmatpush1.msra.mxu0 0.0
        %1388 = vmatprep.subr.mxu0 0.0
        %1389 = vmatpush1.msra.mxu0 0.0
        %1390 = vmatprep.subr.mxu0 0.0
        %1391 = vmatpush1.msra.mxu0 0.0
        %1392 = vmatprep.subr.mxu0 0.0
        %1393 = vmatpush1.msra.mxu0 0.0
        %1394 = vmatprep.subr.mxu0 0.0
        %1395 = vmatpush1.msra.mxu0 0.0
        %1396 = vmatprep.subr.mxu0 0.0
        %1397 = vmatpush1.msra.mxu0 0.0
        %1398 = vmatprep.subr.mxu0 0.0
        %1399 = vmatpush1.msra.mxu0 0.0
        %1400 = vmatprep.subr.mxu0 0.0
        %1401 = vmatpush1.msra.mxu0 0.0
        %1402 = vmatprep.subr.mxu0 0.0
        %1403 = vmatpush1.msra.mxu0 0.0
        %1404 = vmatprep.subr.mxu0 0.0
        %1405 = vmatpush1.msra.mxu0 0.0
        %1406 = vmatprep.subr.mxu0 0.0
        %1407 = vmatpush1.msra.mxu0 0.0
        %1408 = vmatprep.subr.mxu0 0.0
        %1409 = vmatpush1.msra.mxu0 0.0
        %1410 = vmatprep.subr.mxu0 0.0
        %1411 = vmatpush1.msra.mxu0 0.0
        %1412 = vmatprep.subr.mxu0 0.0
        %1413 = vmatpush1.msra.mxu0 0.0
        %1414 = vmatprep.mubr.f32.mxu0 0.0
        %1415 = vmatmul.mubr.f32.gmra.mrb[0].mxu0 %v1348
        %v1416 = vpop.f32.mrb[0].mxu0
        %v1417 = vadd.f32 0.0, %v1416
        %v1418 = vpop.f32.mrb[0].mxu0
        %1419 = vdwg.mxu0
        %v1420 = vld [vmem:[#allocation9 + $0x18] sm:$0xff]
        %v1422 = vsel %vm533, %v1417, 0
        %1424 = vmatprep.subr.mxu0 0.0
        %1425 = vmatpush1.msra.mxu0 %v1420
        %1426 = vmatprep.subr.mxu0 0.0
        %1427 = vmatpush1.msra.mxu0 0.0
        %1428 = vmatprep.subr.mxu0 0.0
        %1429 = vmatpush1.msra.mxu0 0.0
        %1430 = vmatprep.subr.mxu0 0.0
        %1431 = vmatpush1.msra.mxu0 0.0
        %1432 = vmatprep.subr.mxu0 0.0
        %1433 = vmatpush1.msra.mxu0 0.0
        %1434 = vmatprep.subr.mxu0 0.0
        %1435 = vmatpush1.msra.mxu0 0.0
        %1436 = vmatprep.subr.mxu0 0.0
        %1437 = vmatpush1.msra.mxu0 0.0
        %1438 = vmatprep.subr.mxu0 0.0
        %1439 = vmatpush1.msra.mxu0 0.0
        %1440 = vmatprep.subr.mxu0 0.0
        %1441 = vmatpush1.msra.mxu0 0.0
        %1442 = vmatprep.subr.mxu0 0.0
        %1443 = vmatpush1.msra.mxu0 0.0
        %1444 = vmatprep.subr.mxu0 0.0
        %1445 = vmatpush1.msra.mxu0 0.0
        %1446 = vmatprep.subr.mxu0 0.0
        %1447 = vmatpush1.msra.mxu0 0.0
        %1448 = vmatprep.subr.mxu0 0.0
        %1449 = vmatpush1.msra.mxu0 0.0
        %1450 = vmatprep.subr.mxu0 0.0
        %1451 = vmatpush1.msra.mxu0 0.0
        %1452 = vmatprep.subr.mxu0 0.0
        %1453 = vmatpush1.msra.mxu0 0.0
        %1454 = vmatprep.subr.mxu0 0.0
        %1455 = vmatpush1.msra.mxu0 0.0
        %1456 = vmatprep.subr.mxu0 0.0
        %1457 = vmatpush1.msra.mxu0 0.0
        %1458 = vmatprep.subr.mxu0 0.0
        %1459 = vmatpush1.msra.mxu0 0.0
        %1460 = vmatprep.subr.mxu0 0.0
        %1461 = vmatpush1.msra.mxu0 0.0
        %1462 = vmatprep.subr.mxu0 0.0
        %1463 = vmatpush1.msra.mxu0 0.0
        %1464 = vmatprep.subr.mxu0 0.0
        %1465 = vmatpush1.msra.mxu0 0.0
        %1466 = vmatprep.subr.mxu0 0.0
        %1467 = vmatpush1.msra.mxu0 0.0
        %1468 = vmatprep.subr.mxu0 0.0
        %1469 = vmatpush1.msra.mxu0 0.0
        %1470 = vmatprep.subr.mxu0 0.0
        %1471 = vmatpush1.msra.mxu0 0.0
        %1472 = vmatprep.subr.mxu0 0.0
        %1473 = vmatpush1.msra.mxu0 0.0
        %1474 = vmatprep.subr.mxu0 0.0
        %1475 = vmatpush1.msra.mxu0 0.0
        %1476 = vmatprep.subr.mxu0 0.0
        %1477 = vmatpush1.msra.mxu0 0.0
        %1478 = vmatprep.subr.mxu0 0.0
        %1479 = vmatpush1.msra.mxu0 0.0
        %1480 = vmatprep.subr.mxu0 0.0
        %1481 = vmatpush1.msra.mxu0 0.0
        %1482 = vmatprep.subr.mxu0 0.0
        %1483 = vmatpush1.msra.mxu0 0.0
        %1484 = vmatprep.subr.mxu0 0.0
        %1485 = vmatpush1.msra.mxu0 0.0
        %1486 = vmatprep.subr.mxu0 0.0
        %1487 = vmatpush1.msra.mxu0 0.0
        %1488 = vmatprep.mubr.f32.mxu0 0.0
        %1489 = vmatmul.mubr.f32.gmra.mrb[0].mxu0 %v1422
        %v1490 = vpop.f32.mrb[0].mxu0
        %v1491 = vadd.f32 0.0, %v1490
        %v1492 = vpop.f32.mrb[0].mxu0
        %1493 = vdwg.mxu0
        %v1494 = vadd.f32 %v1253, %v1491
        %vm1495 = vcmask 261120
        %1496 = vst.msk [vmem:[%s426] sm:$0xff] %vm1495, %v1494
        %s1497 = scalar_lea.vmem %s365, %s519 [#allocation3]
        %v1498 = vld [vmem:[%s1497] sm:$0xff]
        %v1499 = vadd.f32 %v1494, %v1498
        %v1500 = vsel %vm1495, %v1499, 0.0
        %1501 = vadd.xlane.f32.xlu0 %v1500
        %v1502 = vpop.xlane.xlu0 %1501
        %v1503 = vrcp.pop 32.0
        %v1504 = vmul.f32 %v1502, %v1503
        %v1505 = vsub.f32 %v1499, %v1504
        %v1506 = vmul.f32 %v1505, %v1505
        %v1507 = vsel %vm1495, %v1506, 0.0
        %1508 = vadd.xlane.f32.xlu0 %v1507
        %v1509 = vpop.xlane.xlu0 %1508
        %v1510 = vmul.f32 %v1509, %v1503
        %v1511 = vadd.f32 %v1510, 1e-05
        %v1512 = vrsqrt.pop %v1511
        %v1513 = vmul.f32 %v1505, %v1512
        %v1514 = vld [vmem:[#allocation12] sm:$0x1]
        %v1516 = vlaneseq
        %v1517 = vshrl.u32 %v1516, 7
        %v1518 = vsub.s32 0, %v1517
        %v1519 = vrot.slane %v1514, %v1518
        %v1521 = vmul.f32 %v1513, %v1519
        %v1522 = vld [vmem:[#allocation14] sm:$0x1]
        %v1524 = vlaneseq
        %v1525 = vshrl.u32 %v1524, 7
        %v1526 = vsub.s32 0, %v1525
        %v1527 = vrot.slane %v1522, %v1526
        %v1529 = vadd.f32 %v1521, %v1527
        %1530 = vst.msk [vmem:[%s419] sm:$0xff] %vm1495, %v1529
        %s1531 = sand.u32 %s206, 1
        %s1532 = scalar_lea.sflag [#allocation5], %s1531
        %s1533 = sand.u32 %s206, 1
        %s1534 = smul.addr %s1533, 8
        %s1535 = scalar_lea.vmem [#allocation15], %s1534
        %s1536 = sand.u32 %s234, 1
        %s1537 = scalar_lea.sflag [#allocation17], %s1536
        %s1538 = sand.u32 %s234, 1
        %s1539 = smul.addr %s1538, 8
        %s1540 = scalar_lea.vmem [#allocation16], %s1539
        // Predicated region
        $region81: #{tpu_custom_call.1} parent=47 // pred_check
          %p1541 = pneg %p216
        $region82: #{tpu_custom_call.1} parent=47 // pred_check_branch
          %1543 = sbr.rel (%p1541) target = $region84
        $region83: #{tpu_custom_call.1} parent=47 // pred_region
          %s1545 = ssub.s32 128, 128
          %1546 = vsyncadd %s1532, %s1545
          %s1547 = sadd.s32 %s37, %s36
          %s1548 = smul.addr %s1547, 128
          %s1549 = scalar_lea.hbm %s7, %s1548
          %s1551 = sshll.u32 %s1535, 4
          %s1552 = int_to_ptr.vmem [resolvable:$true] %s1551
          %1554 = dma.vmem_to_hbm [thread:$0]  %s1552, 128, %s1549, %s1532
        $region84: #{tpu_custom_call.1} parent=47 // pred_fallthru
          _
        // Predicated region
        $region85: #{tpu_custom_call.1} parent=47 // pred_check
          %p1555 = pneg %p244
        $region86: #{tpu_custom_call.1} parent=47 // pred_check_branch
          %1557 = sbr.rel (%p1555) target = $region88
        $region87: #{tpu_custom_call.1} parent=47 // pred_region
          %s1559 = ssub.s32 128, 128
          %1560 = vsyncadd %s1537, %s1559
          %s1561 = sadd.s32 %s37, %s36
          %s1562 = smul.addr %s1561, 128
          %s1563 = scalar_lea.hbm %s8, %s1562
          %s1565 = sshll.u32 %s1540, 4
          %s1566 = int_to_ptr.vmem [resolvable:$true] %s1565
          %1568 = dma.vmem_to_hbm [thread:$0]  %s1566, 128, %s1563, %s1537
        $region88: #{tpu_custom_call.1} parent=47 // pred_fallthru
          _
      $region48: #{tpu_custom_call.1} parent=5 // pred_fallthru
        _
      %p1569 = scmp.le.s32.totalorder 2, %s27
      // Predicated region
      $region89: #{tpu_custom_call.1} parent=5 // pred_check
        %p1570 = pneg %p1569
      $region90: #{tpu_custom_call.1} parent=5 // pred_check_branch
        %1572 = sbr.rel (%p1570) target = $region92
      $region91: #{tpu_custom_call.1} parent=5 // pred_region
        %s1573 = ssub.s32 %s27, 2
        // Predicated region
        $region93: #{tpu_custom_call.1} parent=91 // pred_check
          %p1574 = pneg %p222
        $region94: #{tpu_custom_call.1} parent=91 // pred_check_branch
          %1576 = sbr.rel (%p1574) target = $region96
        $region95: #{tpu_custom_call.1} parent=91 // pred_region
          %s1577 = sand.u32 %s207, 1
          %s1578 = scalar_lea.sflag [#allocation5], %s1577
          %s1579 = sand.u32 %s207, 1
          %s1580 = smul.addr %s1579, 8
          %s1581 = scalar_lea.vmem [#allocation15], %s1580
          %1582 = dma.done %s1578, 128
        $region96: #{tpu_custom_call.1} parent=91 // pred_fallthru
          _
        // Predicated region
        $region97: #{tpu_custom_call.1} parent=91 // pred_check
          %p1583 = pneg %p250
        $region98: #{tpu_custom_call.1} parent=91 // pred_check_branch
          %1585 = sbr.rel (%p1583) target = $region100
        $region99: #{tpu_custom_call.1} parent=91 // pred_region
          %s1586 = sand.u32 %s235, 1
          %s1587 = scalar_lea.sflag [#allocation17], %s1586
          %s1588 = sand.u32 %s235, 1
          %s1589 = smul.addr %s1588, 8
          %s1590 = scalar_lea.vmem [#allocation16], %s1589
          %1591 = dma.done %s1587, 128
        $region100: #{tpu_custom_call.1} parent=91 // pred_fallthru
          _
      $region92: #{tpu_custom_call.1} parent=5 // pred_fallthru
        _
    $region6: #{tpu_custom_call.1} parent=1 // loop_footer
      %s31 = sadd.s32 1, %s27
    $region7: #{tpu_custom_call.1} parent=1 // loop_footer_branch
      %26 = sbr.rel target = $region3
    $region8: #{tpu_custom_call.1} parent=1 // loop_exit
      _
    %1592 = vsyncpa [#allocation4], 1
    %s1593 = scalar_lea.sflag [#allocation4], 1
    %1594 = vsyncpa %s1593, 1
    %1595 = vsyncpa [#allocation7], 1
    %1596 = vsyncpa [#allocation10], 1
    %1597 = vsyncpa [#allocation13], 1
    %1598 = vsyncpa [#allocation5], 1
    %s1599 = scalar_lea.sflag [#allocation5], 1
    %1600 = vsyncpa %s1599, 1
    %1601 = vsyncpa [#allocation17], 1
    %s1602 = scalar_lea.sflag [#allocation17], 1
    %1603 = vsyncpa %s1602, 1

</llo_original>
